<compile_context>
chip_gen: v7x
topology: tpu7x:2x2x1
jax: 0.10.0
libtpu: 0.0.40
codegen_flags: <defaults>
</compile_context>

<pallas_src>
import jax
import jax.numpy as jnp
from jax import lax
from jax.experimental import pallas as pl
from jax.experimental.pallas import tpu as pltpu

INPUT_SIZE = 12
HIDDEN_SIZE = 4
OUTPUT_SIZE = 1
NUM_LAYERS = 2  # hard-coded as two explicit layers below


def _make_lstm_kernel(S, B, H):
    """Build a whole-sequence kernel for static (S, B, H)."""

    def kernel(x_ref,            # (S*B, I)
               w_ih1_ref,        # (I, 4H)
               w_hh1_ref,        # (H, 4H)
               b1_ref,           # (1, 4H)   (b_ih_l0 + b_hh_l0)
               w2_ref,           # (2H, 4H)  [W_ih_l1 ; W_hh_l1] stacked
               b2_ref,           # (1, 4H)   (b_ih_l1 + b_hh_l1)
               w_lin_ref,        # (H, O)
               b_lin_ref,        # (1, O)
               out_ref):         # (S*B, O)
        # ---- hoist all weight / bias loads out of the unrolled loop ----
        w_hh1 = w_hh1_ref[...]
        w2 = w2_ref[...]
        b2 = b2_ref[...]
        w_lin = w_lin_ref[...]
        b_lin = b_lin_ref[...]

        # ---- non-recurrent layer-1 input projection, all timesteps at once ----
        xg = jnp.dot(x_ref[...], w_ih1_ref[...],
                     preferred_element_type=jnp.float32) + b1_ref[...]   # (S*B, 4H)

        def gate_act(gates, c_prev):
            # Two whole-tile EUP activations (extra lanes are free), then
            # static lane slices in PyTorch gate order [i, f, g, o].
            sg = jax.nn.sigmoid(gates)
            tg = jnp.tanh(gates)
            i_g = sg[:, 0 * H:1 * H]
            f_g = sg[:, 1 * H:2 * H]
            g_g = tg[:, 2 * H:3 * H]
            o_g = sg[:, 3 * H:4 * H]
            c_new = f_g * c_prev + i_g * g_g
            h_new = o_g * jnp.tanh(c_new)
            return h_new, c_new

        z = jnp.zeros((B, H), jnp.float32)
        h1, c1, h2, c2 = z, z, z, z      # state lives in values/vregs
        h2_steps = []

        # Fully unrolled: S is small and static; per-step critical path is one
        # tiny recurrent dot per layer plus the elementwise cell update.
        for t in range(S):
            # Layer 1: only the recurrent dot remains on the serial path.
            g1 = xg[t * B:(t + 1) * B, :] + jnp.dot(
                h1, w_hh1, preferred_element_type=jnp.float32)
            h1, c1 = gate_act(g1, c1)

            # Layer 2: fused [h1_t, h2_{t-1}] @ [W_ih ; W_hh]  -> single dot.
            g2 = jnp.dot(jnp.concatenate([h1, h2], axis=1), w2,
                         preferred_element_type=jnp.float32) + b2
            h2, c2 = gate_act(g2, c2)
            h2_steps.append(h2)

        # ---- deferred Linear head: one bulk dot + one bulk store ----
        h2_all = jnp.concatenate(h2_steps, axis=0)                       # (S*B, H)
        y = jnp.dot(h2_all, w_lin, preferred_element_type=jnp.float32) + b_lin
        out_ref[...] = y.astype(out_ref.dtype)

    return kernel


def prepare_params(raw):
    """One-time host-side prep (removed from the per-call path):
    transpose weights so the kernel does x @ W, fold the two per-layer bias
    vectors, and stack layer-2's input/recurrent weights for the fused dot."""
    H, O = HIDDEN_SIZE, OUTPUT_SIZE
    return {
        "w_ih1": raw["w_ih_l0"].T,                                       # (I, 4H)
        "w_hh1": raw["w_hh_l0"].T,                                       # (H, 4H)
        "b1": (raw["b_ih_l0"] + raw["b_hh_l0"]).reshape(1, 4 * H),
        "w2": jnp.concatenate([raw["w_ih_l1"].T, raw["w_hh_l1"].T], axis=0),  # (2H, 4H)
        "b2": (raw["b_ih_l1"] + raw["b_hh_l1"]).reshape(1, 4 * H),
        "w_lin": raw["w_lin"].T,                                         # (H, O)
        "b_lin": raw["b_lin"].reshape(1, O),
    }


@jax.jit
def lstm_forward(x, prepped):
    """x: (S, B, I) float32 -> (S, B, O) float32."""
    S, B, I = x.shape
    H, O = HIDDEN_SIZE, OUTPUT_SIZE
    vmem = pl.BlockSpec(memory_space=pltpu.MemorySpace.VMEM)
    kernel = _make_lstm_kernel(S, B, H)

    # TODO(synk): for long sequences, chunk S over a grid axis ("arbitrary")
    # with recurrent state persisting in scratch so x/out are pipelined from
    # HBM instead of held whole in VMEM (scoped-VMEM ceiling is 2x lower on v7x).
    out_flat = pl.pallas_call(
        kernel,
        out_shape=jax.ShapeDtypeStruct((S * B, O), jnp.float32),
        in_specs=[vmem] * 8,
        out_specs=vmem,
    )(x.reshape(S * B, I),
      prepped["w_ih1"], prepped["w_hh1"], prepped["b1"],
      prepped["w2"], prepped["b2"],
      prepped["w_lin"], prepped["b_lin"])
    return out_flat.reshape(S, B, O)


def _init_params(key):
    """Deterministic PyTorch-like init: U(-1/sqrt(H), 1/sqrt(H))."""
    H, I, O = HIDDEN_SIZE, INPUT_SIZE, OUTPUT_SIZE
    bound = 1.0 / (H ** 0.5)
    shapes = {
        "w_ih_l0": (4 * H, I), "w_hh_l0": (4 * H, H),
        "b_ih_l0": (4 * H,), "b_hh_l0": (4 * H,),
        "w_ih_l1": (4 * H, H), "w_hh_l1": (4 * H, H),
        "b_ih_l1": (4 * H,), "b_hh_l1": (4 * H,),
        "w_lin": (O, H), "b_lin": (O,),
    }
    params = {}
    for name, shp in shapes.items():
        key, sub = jax.random.split(key)
        params[name] = jax.random.uniform(sub, shp, jnp.float32, -bound, bound)
    return params


def _reference(x, params):
    """Pure-JAX reference of the PyTorch forward (for correctness check)."""
    H = HIDDEN_SIZE

    def cell(x_t, h, c, w_ih, w_hh, b_ih, b_hh):
        g = x_t @ w_ih.T + h @ w_hh.T + b_ih + b_hh
        i = jax.nn.sigmoid(g[:, 0 * H:1 * H])
        f = jax.nn.sigmoid(g[:, 1 * H:2 * H])
        gg = jnp.tanh(g[:, 2 * H:3 * H])
        o = jax.nn.sigmoid(g[:, 3 * H:4 * H])
        c = f * c + i * gg
        h = o * jnp.tanh(c)
        return h, c

    B = x.shape[1]
    z = jnp.zeros((B, H), jnp.float32)

    def scan_fn(carry, x_t):
        h1, c1, h2, c2 = carry
        h1, c1 = cell(x_t, h1, c1, params["w_ih_l0"], params["w_hh_l0"],
                      params["b_ih_l0"], params["b_hh_l0"])
        h2, c2 = cell(h1, h2, c2, params["w_ih_l1"], params["w_hh_l1"],
                      params["b_ih_l1"], params["b_hh_l1"])
        y = h2 @ params["w_lin"].T + params["b_lin"]
        return (h1, c1, h2, c2), y

    _, ys = lax.scan(scan_fn, (z, z, z, z), x)
    return ys


if __name__ == "__main__":
    S, B = 8, 2
    key = jax.random.PRNGKey(0)
    key, kx = jax.random.split(key)
    x = jax.random.normal(kx, (S, B, INPUT_SIZE), jnp.float32)
    raw = _init_params(key)
    prepped = prepare_params(raw)   # one-time parameter preparation

    out = jax.block_until_ready(lstm_forward(x, prepped))
    ref = jax.block_until_ready(_reference(x, raw))

    assert out.shape == (S, B, OUTPUT_SIZE)
    assert jnp.allclose(out, ref, atol=1e-5, rtol=1e-5), "mismatch vs reference"

    print("KERNEL_OK")
</pallas_src>

<mosaic_0001>
module attributes {stable_mosaic.version = 11 : i64} {
  func.func @kernel(%arg0: memref<16x12xf32, #tpu.memory_space<vmem>>, %arg1: memref<12x16xf32, #tpu.memory_space<vmem>>, %arg2: memref<4x16xf32, #tpu.memory_space<vmem>>, %arg3: memref<1x16xf32, #tpu.memory_space<vmem>>, %arg4: memref<8x16xf32, #tpu.memory_space<vmem>>, %arg5: memref<1x16xf32, #tpu.memory_space<vmem>>, %arg6: memref<4x1xf32, #tpu.memory_space<vmem>>, %arg7: memref<1x1xf32, #tpu.memory_space<vmem>>, %arg8: memref<16x1xf32, #tpu.memory_space<vmem>>) attributes {dimension_semantics = [], scalar_prefetch = 0 : i64, scratch_operands = 0 : i64, tpu.core_type = #tpu.core_type<tc>} {
    %c0 = arith.constant 0 : index
    %c0_0 = arith.constant 0 : index
    %0 = vector.load %arg2[%c0, %c0_0] : memref<4x16xf32, #tpu.memory_space<vmem>>, vector<4x16xf32>
    %c0_1 = arith.constant 0 : index
    %c0_2 = arith.constant 0 : index
    %1 = vector.load %arg4[%c0_1, %c0_2] : memref<8x16xf32, #tpu.memory_space<vmem>>, vector<8x16xf32>
    %c0_3 = arith.constant 0 : index
    %c0_4 = arith.constant 0 : index
    %2 = vector.load %arg5[%c0_3, %c0_4] : memref<1x16xf32, #tpu.memory_space<vmem>>, vector<1x16xf32>
    %c0_5 = arith.constant 0 : index
    %c0_6 = arith.constant 0 : index
    %3 = vector.load %arg6[%c0_5, %c0_6] : memref<4x1xf32, #tpu.memory_space<vmem>>, vector<4x1xf32>
    %c0_7 = arith.constant 0 : index
    %c0_8 = arith.constant 0 : index
    %4 = vector.load %arg7[%c0_7, %c0_8] : memref<1x1xf32, #tpu.memory_space<vmem>>, vector<1x1xf32>
    %c0_9 = arith.constant 0 : index
    %c0_10 = arith.constant 0 : index
    %5 = vector.load %arg0[%c0_9, %c0_10] : memref<16x12xf32, #tpu.memory_space<vmem>>, vector<16x12xf32>
    %c0_11 = arith.constant 0 : index
    %c0_12 = arith.constant 0 : index
    %6 = vector.load %arg1[%c0_11, %c0_12] : memref<12x16xf32, #tpu.memory_space<vmem>>, vector<12x16xf32>
    %cst = arith.constant dense<0.000000e+00> : vector<16x16xf32>
    %7 = tpu.matmul %5, %6, %cst {dimension_numbers = #tpu.dot_dimension_numbers<[1], [0], [0], [1], [0, 0, 1, 1], [], []>} : vector<16x12xf32>, vector<12x16xf32>, vector<16x16xf32> -> vector<16x16xf32>
    %c0_13 = arith.constant 0 : index
    %c0_14 = arith.constant 0 : index
    %8 = vector.load %arg3[%c0_13, %c0_14] : memref<1x16xf32, #tpu.memory_space<vmem>>, vector<1x16xf32>
    %9 = vector.broadcast %8 : vector<1x16xf32> to vector<16x16xf32>
    %10 = arith.addf %7, %9 : vector<16x16xf32>
    %cst_15 = arith.constant 0.000000e+00 : f32
    %11 = vector.broadcast %cst_15 : f32 to vector<2x4xf32>
    %12 = vector.extract_strided_slice %10 {offsets = [0, 0], sizes = [2, 16], strides = [1, 1]} : vector<16x16xf32> to vector<2x16xf32>
    %cst_16 = arith.constant dense<0.000000e+00> : vector<2x16xf32>
    %13 = tpu.matmul %11, %0, %cst_16 {dimension_numbers = #tpu.dot_dimension_numbers<[1], [0], [0], [1], [0, 0, 1, 1], [], []>} : vector<2x4xf32>, vector<4x16xf32>, vector<2x16xf32> -> vector<2x16xf32>
    %14 = arith.addf %12, %13 : vector<2x16xf32>
    %15 = arith.negf %14 : vector<2x16xf32>
    %16 = math.exp %15 : vector<2x16xf32>
    %cst_17 = arith.constant 1.000000e+00 : f32
    %17 = vector.broadcast %cst_17 : f32 to vector<2x16xf32>
    %18 = arith.addf %17, %16 : vector<2x16xf32>
    %19 = arith.divf %17, %18 : vector<2x16xf32>
    %20 = math.tanh %14 : vector<2x16xf32>
    %21 = vector.extract_strided_slice %19 {offsets = [0, 0], sizes = [2, 4], strides = [1, 1]} : vector<2x16xf32> to vector<2x4xf32>
    %22 = vector.extract_strided_slice %19 {offsets = [0, 4], sizes = [2, 4], strides = [1, 1]} : vector<2x16xf32> to vector<2x4xf32>
    %23 = vector.extract_strided_slice %20 {offsets = [0, 8], sizes = [2, 4], strides = [1, 1]} : vector<2x16xf32> to vector<2x4xf32>
    %24 = vector.extract_strided_slice %19 {offsets = [0, 12], sizes = [2, 4], strides = [1, 1]} : vector<2x16xf32> to vector<2x4xf32>
    %25 = arith.mulf %22, %11 : vector<2x4xf32>
    %26 = arith.mulf %21, %23 : vector<2x4xf32>
    %27 = arith.addf %25, %26 : vector<2x4xf32>
    %28 = math.tanh %27 : vector<2x4xf32>
    %29 = arith.mulf %24, %28 : vector<2x4xf32>
    %30 = tpu.concatenate %29, %11 in 1 : vector<2x4xf32>, vector<2x4xf32> -> vector<2x8xf32>
    %cst_18 = arith.constant dense<0.000000e+00> : vector<2x16xf32>
    %31 = tpu.matmul %30, %1, %cst_18 {dimension_numbers = #tpu.dot_dimension_numbers<[1], [0], [0], [1], [0, 0, 1, 1], [], []>} : vector<2x8xf32>, vector<8x16xf32>, vector<2x16xf32> -> vector<2x16xf32>
    %32 = vector.broadcast %2 : vector<1x16xf32> to vector<2x16xf32>
    %33 = arith.addf %31, %32 : vector<2x16xf32>
    %34 = arith.negf %33 : vector<2x16xf32>
    %35 = math.exp %34 : vector<2x16xf32>
    %cst_19 = arith.constant 1.000000e+00 : f32
    %36 = vector.broadcast %cst_19 : f32 to vector<2x16xf32>
    %37 = arith.addf %36, %35 : vector<2x16xf32>
    %38 = arith.divf %36, %37 : vector<2x16xf32>
    %39 = math.tanh %33 : vector<2x16xf32>
    %40 = vector.extract_strided_slice %38 {offsets = [0, 0], sizes = [2, 4], strides = [1, 1]} : vector<2x16xf32> to vector<2x4xf32>
    %41 = vector.extract_strided_slice %38 {offsets = [0, 4], sizes = [2, 4], strides = [1, 1]} : vector<2x16xf32> to vector<2x4xf32>
    %42 = vector.extract_strided_slice %39 {offsets = [0, 8], sizes = [2, 4], strides = [1, 1]} : vector<2x16xf32> to vector<2x4xf32>
    %43 = vector.extract_strided_slice %38 {offsets = [0, 12], sizes = [2, 4], strides = [1, 1]} : vector<2x16xf32> to vector<2x4xf32>
    %44 = arith.mulf %41, %11 : vector<2x4xf32>
    %45 = arith.mulf %40, %42 : vector<2x4xf32>
    %46 = arith.addf %44, %45 : vector<2x4xf32>
    %47 = math.tanh %46 : vector<2x4xf32>
    %48 = arith.mulf %43, %47 : vector<2x4xf32>
    %49 = vector.extract_strided_slice %10 {offsets = [2, 0], sizes = [2, 16], strides = [1, 1]} : vector<16x16xf32> to vector<2x16xf32>
    %cst_20 = arith.constant dense<0.000000e+00> : vector<2x16xf32>
    %50 = tpu.matmul %29, %0, %cst_20 {dimension_numbers = #tpu.dot_dimension_numbers<[1], [0], [0], [1], [0, 0, 1, 1], [], []>} : vector<2x4xf32>, vector<4x16xf32>, vector<2x16xf32> -> vector<2x16xf32>
    %51 = arith.addf %49, %50 : vector<2x16xf32>
    %52 = arith.negf %51 : vector<2x16xf32>
    %53 = math.exp %52 : vector<2x16xf32>
    %cst_21 = arith.constant 1.000000e+00 : f32
    %54 = vector.broadcast %cst_21 : f32 to vector<2x16xf32>
    %55 = arith.addf %54, %53 : vector<2x16xf32>
    %56 = arith.divf %54, %55 : vector<2x16xf32>
    %57 = math.tanh %51 : vector<2x16xf32>
    %58 = vector.extract_strided_slice %56 {offsets = [0, 0], sizes = [2, 4], strides = [1, 1]} : vector<2x16xf32> to vector<2x4xf32>
    %59 = vector.extract_strided_slice %56 {offsets = [0, 4], sizes = [2, 4], strides = [1, 1]} : vector<2x16xf32> to vector<2x4xf32>
    %60 = vector.extract_strided_slice %57 {offsets = [0, 8], sizes = [2, 4], strides = [1, 1]} : vector<2x16xf32> to vector<2x4xf32>
    %61 = vector.extract_strided_slice %56 {offsets = [0, 12], sizes = [2, 4], strides = [1, 1]} : vector<2x16xf32> to vector<2x4xf32>
    %62 = arith.mulf %59, %27 : vector<2x4xf32>
    %63 = arith.mulf %58, %60 : vector<2x4xf32>
    %64 = arith.addf %62, %63 : vector<2x4xf32>
    %65 = math.tanh %64 : vector<2x4xf32>
    %66 = arith.mulf %61, %65 : vector<2x4xf32>
    %67 = tpu.concatenate %66, %48 in 1 : vector<2x4xf32>, vector<2x4xf32> -> vector<2x8xf32>
    %cst_22 = arith.constant dense<0.000000e+00> : vector<2x16xf32>
    %68 = tpu.matmul %67, %1, %cst_22 {dimension_numbers = #tpu.dot_dimension_numbers<[1], [0], [0], [1], [0, 0, 1, 1], [], []>} : vector<2x8xf32>, vector<8x16xf32>, vector<2x16xf32> -> vector<2x16xf32>
    %69 = vector.broadcast %2 : vector<1x16xf32> to vector<2x16xf32>
    %70 = arith.addf %68, %69 : vector<2x16xf32>
    %71 = arith.negf %70 : vector<2x16xf32>
    %72 = math.exp %71 : vector<2x16xf32>
    %cst_23 = arith.constant 1.000000e+00 : f32
    %73 = vector.broadcast %cst_23 : f32 to vector<2x16xf32>
    %74 = arith.addf %73, %72 : vector<2x16xf32>
    %75 = arith.divf %73, %74 : vector<2x16xf32>
    %76 = math.tanh %70 : vector<2x16xf32>
    %77 = vector.extract_strided_slice %75 {offsets = [0, 0], sizes = [2, 4], strides = [1, 1]} : vector<2x16xf32> to vector<2x4xf32>
    %78 = vector.extract_strided_slice %75 {offsets = [0, 4], sizes = [2, 4], strides = [1, 1]} : vector<2x16xf32> to vector<2x4xf32>
    %79 = vector.extract_strided_slice %76 {offsets = [0, 8], sizes = [2, 4], strides = [1, 1]} : vector<2x16xf32> to vector<2x4xf32>
    %80 = vector.extract_strided_slice %75 {offsets = [0, 12], sizes = [2, 4], strides = [1, 1]} : vector<2x16xf32> to vector<2x4xf32>
    %81 = arith.mulf %78, %46 : vector<2x4xf32>
    %82 = arith.mulf %77, %79 : vector<2x4xf32>
    %83 = arith.addf %81, %82 : vector<2x4xf32>
    %84 = math.tanh %83 : vector<2x4xf32>
    %85 = arith.mulf %80, %84 : vector<2x4xf32>
    %86 = vector.extract_strided_slice %10 {offsets = [4, 0], sizes = [2, 16], strides = [1, 1]} : vector<16x16xf32> to vector<2x16xf32>
    %cst_24 = arith.constant dense<0.000000e+00> : vector<2x16xf32>
    %87 = tpu.matmul %66, %0, %cst_24 {dimension_numbers = #tpu.dot_dimension_numbers<[1], [0], [0], [1], [0, 0, 1, 1], [], []>} : vector<2x4xf32>, vector<4x16xf32>, vector<2x16xf32> -> vector<2x16xf32>
    %88 = arith.addf %86, %87 : vector<2x16xf32>
    %89 = arith.negf %88 : vector<2x16xf32>
    %90 = math.exp %89 : vector<2x16xf32>
    %cst_25 = arith.constant 1.000000e+00 : f32
    %91 = vector.broadcast %cst_25 : f32 to vector<2x16xf32>
    %92 = arith.addf %91, %90 : vector<2x16xf32>
    %93 = arith.divf %91, %92 : vector<2x16xf32>
    %94 = math.tanh %88 : vector<2x16xf32>
    %95 = vector.extract_strided_slice %93 {offsets = [0, 0], sizes = [2, 4], strides = [1, 1]} : vector<2x16xf32> to vector<2x4xf32>
    %96 = vector.extract_strided_slice %93 {offsets = [0, 4], sizes = [2, 4], strides = [1, 1]} : vector<2x16xf32> to vector<2x4xf32>
    %97 = vector.extract_strided_slice %94 {offsets = [0, 8], sizes = [2, 4], strides = [1, 1]} : vector<2x16xf32> to vector<2x4xf32>
    %98 = vector.extract_strided_slice %93 {offsets = [0, 12], sizes = [2, 4], strides = [1, 1]} : vector<2x16xf32> to vector<2x4xf32>
    %99 = arith.mulf %96, %64 : vector<2x4xf32>
    %100 = arith.mulf %95, %97 : vector<2x4xf32>
    %101 = arith.addf %99, %100 : vector<2x4xf32>
    %102 = math.tanh %101 : vector<2x4xf32>
    %103 = arith.mulf %98, %102 : vector<2x4xf32>
    %104 = tpu.concatenate %103, %85 in 1 : vector<2x4xf32>, vector<2x4xf32> -> vector<2x8xf32>
    %cst_26 = arith.constant dense<0.000000e+00> : vector<2x16xf32>
    %105 = tpu.matmul %104, %1, %cst_26 {dimension_numbers = #tpu.dot_dimension_numbers<[1], [0], [0], [1], [0, 0, 1, 1], [], []>} : vector<2x8xf32>, vector<8x16xf32>, vector<2x16xf32> -> vector<2x16xf32>
    %106 = vector.broadcast %2 : vector<1x16xf32> to vector<2x16xf32>
    %107 = arith.addf %105, %106 : vector<2x16xf32>
    %108 = arith.negf %107 : vector<2x16xf32>
    %109 = math.exp %108 : vector<2x16xf32>
    %cst_27 = arith.constant 1.000000e+00 : f32
    %110 = vector.broadcast %cst_27 : f32 to vector<2x16xf32>
    %111 = arith.addf %110, %109 : vector<2x16xf32>
    %112 = arith.divf %110, %111 : vector<2x16xf32>
    %113 = math.tanh %107 : vector<2x16xf32>
    %114 = vector.extract_strided_slice %112 {offsets = [0, 0], sizes = [2, 4], strides = [1, 1]} : vector<2x16xf32> to vector<2x4xf32>
    %115 = vector.extract_strided_slice %112 {offsets = [0, 4], sizes = [2, 4], strides = [1, 1]} : vector<2x16xf32> to vector<2x4xf32>
    %116 = vector.extract_strided_slice %113 {offsets = [0, 8], sizes = [2, 4], strides = [1, 1]} : vector<2x16xf32> to vector<2x4xf32>
    %117 = vector.extract_strided_slice %112 {offsets = [0, 12], sizes = [2, 4], strides = [1, 1]} : vector<2x16xf32> to vector<2x4xf32>
    %118 = arith.mulf %115, %83 : vector<2x4xf32>
    %119 = arith.mulf %114, %116 : vector<2x4xf32>
    %120 = arith.addf %118, %119 : vector<2x4xf32>
    %121 = math.tanh %120 : vector<2x4xf32>
    %122 = arith.mulf %117, %121 : vector<2x4xf32>
    %123 = vector.extract_strided_slice %10 {offsets = [6, 0], sizes = [2, 16], strides = [1, 1]} : vector<16x16xf32> to vector<2x16xf32>
    %cst_28 = arith.constant dense<0.000000e+00> : vector<2x16xf32>
    %124 = tpu.matmul %103, %0, %cst_28 {dimension_numbers = #tpu.dot_dimension_numbers<[1], [0], [0], [1], [0, 0, 1, 1], [], []>} : vector<2x4xf32>, vector<4x16xf32>, vector<2x16xf32> -> vector<2x16xf32>
    %125 = arith.addf %123, %124 : vector<2x16xf32>
    %126 = arith.negf %125 : vector<2x16xf32>
    %127 = math.exp %126 : vector<2x16xf32>
    %cst_29 = arith.constant 1.000000e+00 : f32
    %128 = vector.broadcast %cst_29 : f32 to vector<2x16xf32>
    %129 = arith.addf %128, %127 : vector<2x16xf32>
    %130 = arith.divf %128, %129 : vector<2x16xf32>
    %131 = math.tanh %125 : vector<2x16xf32>
    %132 = vector.extract_strided_slice %130 {offsets = [0, 0], sizes = [2, 4], strides = [1, 1]} : vector<2x16xf32> to vector<2x4xf32>
    %133 = vector.extract_strided_slice %130 {offsets = [0, 4], sizes = [2, 4], strides = [1, 1]} : vector<2x16xf32> to vector<2x4xf32>
    %134 = vector.extract_strided_slice %131 {offsets = [0, 8], sizes = [2, 4], strides = [1, 1]} : vector<2x16xf32> to vector<2x4xf32>
    %135 = vector.extract_strided_slice %130 {offsets = [0, 12], sizes = [2, 4], strides = [1, 1]} : vector<2x16xf32> to vector<2x4xf32>
    %136 = arith.mulf %133, %101 : vector<2x4xf32>
    %137 = arith.mulf %132, %134 : vector<2x4xf32>
    %138 = arith.addf %136, %137 : vector<2x4xf32>
    %139 = math.tanh %138 : vector<2x4xf32>
    %140 = arith.mulf %135, %139 : vector<2x4xf32>
    %141 = tpu.concatenate %140, %122 in 1 : vector<2x4xf32>, vector<2x4xf32> -> vector<2x8xf32>
    %cst_30 = arith.constant dense<0.000000e+00> : vector<2x16xf32>
    %142 = tpu.matmul %141, %1, %cst_30 {dimension_numbers = #tpu.dot_dimension_numbers<[1], [0], [0], [1], [0, 0, 1, 1], [], []>} : vector<2x8xf32>, vector<8x16xf32>, vector<2x16xf32> -> vector<2x16xf32>
    %143 = vector.broadcast %2 : vector<1x16xf32> to vector<2x16xf32>
    %144 = arith.addf %142, %143 : vector<2x16xf32>
    %145 = arith.negf %144 : vector<2x16xf32>
    %146 = math.exp %145 : vector<2x16xf32>
    %cst_31 = arith.constant 1.000000e+00 : f32
    %147 = vector.broadcast %cst_31 : f32 to vector<2x16xf32>
    %148 = arith.addf %147, %146 : vector<2x16xf32>
    %149 = arith.divf %147, %148 : vector<2x16xf32>
    %150 = math.tanh %144 : vector<2x16xf32>
    %151 = vector.extract_strided_slice %149 {offsets = [0, 0], sizes = [2, 4], strides = [1, 1]} : vector<2x16xf32> to vector<2x4xf32>
    %152 = vector.extract_strided_slice %149 {offsets = [0, 4], sizes = [2, 4], strides = [1, 1]} : vector<2x16xf32> to vector<2x4xf32>
    %153 = vector.extract_strided_slice %150 {offsets = [0, 8], sizes = [2, 4], strides = [1, 1]} : vector<2x16xf32> to vector<2x4xf32>
    %154 = vector.extract_strided_slice %149 {offsets = [0, 12], sizes = [2, 4], strides = [1, 1]} : vector<2x16xf32> to vector<2x4xf32>
    %155 = arith.mulf %152, %120 : vector<2x4xf32>
    %156 = arith.mulf %151, %153 : vector<2x4xf32>
    %157 = arith.addf %155, %156 : vector<2x4xf32>
    %158 = math.tanh %157 : vector<2x4xf32>
    %159 = arith.mulf %154, %158 : vector<2x4xf32>
    %160 = vector.extract_strided_slice %10 {offsets = [8, 0], sizes = [2, 16], strides = [1, 1]} : vector<16x16xf32> to vector<2x16xf32>
    %cst_32 = arith.constant dense<0.000000e+00> : vector<2x16xf32>
    %161 = tpu.matmul %140, %0, %cst_32 {dimension_numbers = #tpu.dot_dimension_numbers<[1], [0], [0], [1], [0, 0, 1, 1], [], []>} : vector<2x4xf32>, vector<4x16xf32>, vector<2x16xf32> -> vector<2x16xf32>
    %162 = arith.addf %160, %161 : vector<2x16xf32>
    %163 = arith.negf %162 : vector<2x16xf32>
    %164 = math.exp %163 : vector<2x16xf32>
    %cst_33 = arith.constant 1.000000e+00 : f32
    %165 = vector.broadcast %cst_33 : f32 to vector<2x16xf32>
    %166 = arith.addf %165, %164 : vector<2x16xf32>
    %167 = arith.divf %165, %166 : vector<2x16xf32>
    %168 = math.tanh %162 : vector<2x16xf32>
    %169 = vector.extract_strided_slice %167 {offsets = [0, 0], sizes = [2, 4], strides = [1, 1]} : vector<2x16xf32> to vector<2x4xf32>
    %170 = vector.extract_strided_slice %167 {offsets = [0, 4], sizes = [2, 4], strides = [1, 1]} : vector<2x16xf32> to vector<2x4xf32>
    %171 = vector.extract_strided_slice %168 {offsets = [0, 8], sizes = [2, 4], strides = [1, 1]} : vector<2x16xf32> to vector<2x4xf32>
    %172 = vector.extract_strided_slice %167 {offsets = [0, 12], sizes = [2, 4], strides = [1, 1]} : vector<2x16xf32> to vector<2x4xf32>
    %173 = arith.mulf %170, %138 : vector<2x4xf32>
    %174 = arith.mulf %169, %171 : vector<2x4xf32>
    %175 = arith.addf %173, %174 : vector<2x4xf32>
    %176 = math.tanh %175 : vector<2x4xf32>
    %177 = arith.mulf %172, %176 : vector<2x4xf32>
    %178 = tpu.concatenate %177, %159 in 1 : vector<2x4xf32>, vector<2x4xf32> -> vector<2x8xf32>
    %cst_34 = arith.constant dense<0.000000e+00> : vector<2x16xf32>
    %179 = tpu.matmul %178, %1, %cst_34 {dimension_numbers = #tpu.dot_dimension_numbers<[1], [0], [0], [1], [0, 0, 1, 1], [], []>} : vector<2x8xf32>, vector<8x16xf32>, vector<2x16xf32> -> vector<2x16xf32>
    %180 = vector.broadcast %2 : vector<1x16xf32> to vector<2x16xf32>
    %181 = arith.addf %179, %180 : vector<2x16xf32>
    %182 = arith.negf %181 : vector<2x16xf32>
    %183 = math.exp %182 : vector<2x16xf32>
    %cst_35 = arith.constant 1.000000e+00 : f32
    %184 = vector.broadcast %cst_35 : f32 to vector<2x16xf32>
    %185 = arith.addf %184, %183 : vector<2x16xf32>
    %186 = arith.divf %184, %185 : vector<2x16xf32>
    %187 = math.tanh %181 : vector<2x16xf32>
    %188 = vector.extract_strided_slice %186 {offsets = [0, 0], sizes = [2, 4], strides = [1, 1]} : vector<2x16xf32> to vector<2x4xf32>
    %189 = vector.extract_strided_slice %186 {offsets = [0, 4], sizes = [2, 4], strides = [1, 1]} : vector<2x16xf32> to vector<2x4xf32>
    %190 = vector.extract_strided_slice %187 {offsets = [0, 8], sizes = [2, 4], strides = [1, 1]} : vector<2x16xf32> to vector<2x4xf32>
    %191 = vector.extract_strided_slice %186 {offsets = [0, 12], sizes = [2, 4], strides = [1, 1]} : vector<2x16xf32> to vector<2x4xf32>
    %192 = arith.mulf %189, %157 : vector<2x4xf32>
    %193 = arith.mulf %188, %190 : vector<2x4xf32>
    %194 = arith.addf %192, %193 : vector<2x4xf32>
    %195 = math.tanh %194 : vector<2x4xf32>
    %196 = arith.mulf %191, %195 : vector<2x4xf32>
    %197 = vector.extract_strided_slice %10 {offsets = [10, 0], sizes = [2, 16], strides = [1, 1]} : vector<16x16xf32> to vector<2x16xf32>
    %cst_36 = arith.constant dense<0.000000e+00> : vector<2x16xf32>
    %198 = tpu.matmul %177, %0, %cst_36 {dimension_numbers = #tpu.dot_dimension_numbers<[1], [0], [0], [1], [0, 0, 1, 1], [], []>} : vector<2x4xf32>, vector<4x16xf32>, vector<2x16xf32> -> vector<2x16xf32>
    %199 = arith.addf %197, %198 : vector<2x16xf32>
    %200 = arith.negf %199 : vector<2x16xf32>
    %201 = math.exp %200 : vector<2x16xf32>
    %cst_37 = arith.constant 1.000000e+00 : f32
    %202 = vector.broadcast %cst_37 : f32 to vector<2x16xf32>
    %203 = arith.addf %202, %201 : vector<2x16xf32>
    %204 = arith.divf %202, %203 : vector<2x16xf32>
    %205 = math.tanh %199 : vector<2x16xf32>
    %206 = vector.extract_strided_slice %204 {offsets = [0, 0], sizes = [2, 4], strides = [1, 1]} : vector<2x16xf32> to vector<2x4xf32>
    %207 = vector.extract_strided_slice %204 {offsets = [0, 4], sizes = [2, 4], strides = [1, 1]} : vector<2x16xf32> to vector<2x4xf32>
    %208 = vector.extract_strided_slice %205 {offsets = [0, 8], sizes = [2, 4], strides = [1, 1]} : vector<2x16xf32> to vector<2x4xf32>
    %209 = vector.extract_strided_slice %204 {offsets = [0, 12], sizes = [2, 4], strides = [1, 1]} : vector<2x16xf32> to vector<2x4xf32>
    %210 = arith.mulf %207, %175 : vector<2x4xf32>
    %211 = arith.mulf %206, %208 : vector<2x4xf32>
    %212 = arith.addf %210, %211 : vector<2x4xf32>
    %213 = math.tanh %212 : vector<2x4xf32>
    %214 = arith.mulf %209, %213 : vector<2x4xf32>
    %215 = tpu.concatenate %214, %196 in 1 : vector<2x4xf32>, vector<2x4xf32> -> vector<2x8xf32>
    %cst_38 = arith.constant dense<0.000000e+00> : vector<2x16xf32>
    %216 = tpu.matmul %215, %1, %cst_38 {dimension_numbers = #tpu.dot_dimension_numbers<[1], [0], [0], [1], [0, 0, 1, 1], [], []>} : vector<2x8xf32>, vector<8x16xf32>, vector<2x16xf32> -> vector<2x16xf32>
    %217 = vector.broadcast %2 : vector<1x16xf32> to vector<2x16xf32>
    %218 = arith.addf %216, %217 : vector<2x16xf32>
    %219 = arith.negf %218 : vector<2x16xf32>
    %220 = math.exp %219 : vector<2x16xf32>
    %cst_39 = arith.constant 1.000000e+00 : f32
    %221 = vector.broadcast %cst_39 : f32 to vector<2x16xf32>
    %222 = arith.addf %221, %220 : vector<2x16xf32>
    %223 = arith.divf %221, %222 : vector<2x16xf32>
    %224 = math.tanh %218 : vector<2x16xf32>
    %225 = vector.extract_strided_slice %223 {offsets = [0, 0], sizes = [2, 4], strides = [1, 1]} : vector<2x16xf32> to vector<2x4xf32>
    %226 = vector.extract_strided_slice %223 {offsets = [0, 4], sizes = [2, 4], strides = [1, 1]} : vector<2x16xf32> to vector<2x4xf32>
    %227 = vector.extract_strided_slice %224 {offsets = [0, 8], sizes = [2, 4], strides = [1, 1]} : vector<2x16xf32> to vector<2x4xf32>
    %228 = vector.extract_strided_slice %223 {offsets = [0, 12], sizes = [2, 4], strides = [1, 1]} : vector<2x16xf32> to vector<2x4xf32>
    %229 = arith.mulf %226, %194 : vector<2x4xf32>
    %230 = arith.mulf %225, %227 : vector<2x4xf32>
    %231 = arith.addf %229, %230 : vector<2x4xf32>
    %232 = math.tanh %231 : vector<2x4xf32>
    %233 = arith.mulf %228, %232 : vector<2x4xf32>
    %234 = vector.extract_strided_slice %10 {offsets = [12, 0], sizes = [2, 16], strides = [1, 1]} : vector<16x16xf32> to vector<2x16xf32>
    %cst_40 = arith.constant dense<0.000000e+00> : vector<2x16xf32>
    %235 = tpu.matmul %214, %0, %cst_40 {dimension_numbers = #tpu.dot_dimension_numbers<[1], [0], [0], [1], [0, 0, 1, 1], [], []>} : vector<2x4xf32>, vector<4x16xf32>, vector<2x16xf32> -> vector<2x16xf32>
    %236 = arith.addf %234, %235 : vector<2x16xf32>
    %237 = arith.negf %236 : vector<2x16xf32>
    %238 = math.exp %237 : vector<2x16xf32>
    %cst_41 = arith.constant 1.000000e+00 : f32
    %239 = vector.broadcast %cst_41 : f32 to vector<2x16xf32>
    %240 = arith.addf %239, %238 : vector<2x16xf32>
    %241 = arith.divf %239, %240 : vector<2x16xf32>
    %242 = math.tanh %236 : vector<2x16xf32>
    %243 = vector.extract_strided_slice %241 {offsets = [0, 0], sizes = [2, 4], strides = [1, 1]} : vector<2x16xf32> to vector<2x4xf32>
    %244 = vector.extract_strided_slice %241 {offsets = [0, 4], sizes = [2, 4], strides = [1, 1]} : vector<2x16xf32> to vector<2x4xf32>
    %245 = vector.extract_strided_slice %242 {offsets = [0, 8], sizes = [2, 4], strides = [1, 1]} : vector<2x16xf32> to vector<2x4xf32>
    %246 = vector.extract_strided_slice %241 {offsets = [0, 12], sizes = [2, 4], strides = [1, 1]} : vector<2x16xf32> to vector<2x4xf32>
    %247 = arith.mulf %244, %212 : vector<2x4xf32>
    %248 = arith.mulf %243, %245 : vector<2x4xf32>
    %249 = arith.addf %247, %248 : vector<2x4xf32>
    %250 = math.tanh %249 : vector<2x4xf32>
    %251 = arith.mulf %246, %250 : vector<2x4xf32>
    %252 = tpu.concatenate %251, %233 in 1 : vector<2x4xf32>, vector<2x4xf32> -> vector<2x8xf32>
    %cst_42 = arith.constant dense<0.000000e+00> : vector<2x16xf32>
    %253 = tpu.matmul %252, %1, %cst_42 {dimension_numbers = #tpu.dot_dimension_numbers<[1], [0], [0], [1], [0, 0, 1, 1], [], []>} : vector<2x8xf32>, vector<8x16xf32>, vector<2x16xf32> -> vector<2x16xf32>
    %254 = vector.broadcast %2 : vector<1x16xf32> to vector<2x16xf32>
    %255 = arith.addf %253, %254 : vector<2x16xf32>
    %256 = arith.negf %255 : vector<2x16xf32>
    %257 = math.exp %256 : vector<2x16xf32>
    %cst_43 = arith.constant 1.000000e+00 : f32
    %258 = vector.broadcast %cst_43 : f32 to vector<2x16xf32>
    %259 = arith.addf %258, %257 : vector<2x16xf32>
    %260 = arith.divf %258, %259 : vector<2x16xf32>
    %261 = math.tanh %255 : vector<2x16xf32>
    %262 = vector.extract_strided_slice %260 {offsets = [0, 0], sizes = [2, 4], strides = [1, 1]} : vector<2x16xf32> to vector<2x4xf32>
    %263 = vector.extract_strided_slice %260 {offsets = [0, 4], sizes = [2, 4], strides = [1, 1]} : vector<2x16xf32> to vector<2x4xf32>
    %264 = vector.extract_strided_slice %261 {offsets = [0, 8], sizes = [2, 4], strides = [1, 1]} : vector<2x16xf32> to vector<2x4xf32>
    %265 = vector.extract_strided_slice %260 {offsets = [0, 12], sizes = [2, 4], strides = [1, 1]} : vector<2x16xf32> to vector<2x4xf32>
    %266 = arith.mulf %263, %231 : vector<2x4xf32>
    %267 = arith.mulf %262, %264 : vector<2x4xf32>
    %268 = arith.addf %266, %267 : vector<2x4xf32>
    %269 = math.tanh %268 : vector<2x4xf32>
    %270 = arith.mulf %265, %269 : vector<2x4xf32>
    %271 = vector.extract_strided_slice %10 {offsets = [14, 0], sizes = [2, 16], strides = [1, 1]} : vector<16x16xf32> to vector<2x16xf32>
    %cst_44 = arith.constant dense<0.000000e+00> : vector<2x16xf32>
    %272 = tpu.matmul %251, %0, %cst_44 {dimension_numbers = #tpu.dot_dimension_numbers<[1], [0], [0], [1], [0, 0, 1, 1], [], []>} : vector<2x4xf32>, vector<4x16xf32>, vector<2x16xf32> -> vector<2x16xf32>
    %273 = arith.addf %271, %272 : vector<2x16xf32>
    %274 = arith.negf %273 : vector<2x16xf32>
    %275 = math.exp %274 : vector<2x16xf32>
    %cst_45 = arith.constant 1.000000e+00 : f32
    %276 = vector.broadcast %cst_45 : f32 to vector<2x16xf32>
    %277 = arith.addf %276, %275 : vector<2x16xf32>
    %278 = arith.divf %276, %277 : vector<2x16xf32>
    %279 = math.tanh %273 : vector<2x16xf32>
    %280 = vector.extract_strided_slice %278 {offsets = [0, 0], sizes = [2, 4], strides = [1, 1]} : vector<2x16xf32> to vector<2x4xf32>
    %281 = vector.extract_strided_slice %278 {offsets = [0, 4], sizes = [2, 4], strides = [1, 1]} : vector<2x16xf32> to vector<2x4xf32>
    %282 = vector.extract_strided_slice %279 {offsets = [0, 8], sizes = [2, 4], strides = [1, 1]} : vector<2x16xf32> to vector<2x4xf32>
    %283 = vector.extract_strided_slice %278 {offsets = [0, 12], sizes = [2, 4], strides = [1, 1]} : vector<2x16xf32> to vector<2x4xf32>
    %284 = arith.mulf %281, %249 : vector<2x4xf32>
    %285 = arith.mulf %280, %282 : vector<2x4xf32>
    %286 = arith.addf %284, %285 : vector<2x4xf32>
    %287 = math.tanh %286 : vector<2x4xf32>
    %288 = arith.mulf %283, %287 : vector<2x4xf32>
    %289 = tpu.concatenate %288, %270 in 1 : vector<2x4xf32>, vector<2x4xf32> -> vector<2x8xf32>
    %cst_46 = arith.constant dense<0.000000e+00> : vector<2x16xf32>
    %290 = tpu.matmul %289, %1, %cst_46 {dimension_numbers = #tpu.dot_dimension_numbers<[1], [0], [0], [1], [0, 0, 1, 1], [], []>} : vector<2x8xf32>, vector<8x16xf32>, vector<2x16xf32> -> vector<2x16xf32>
    %291 = vector.broadcast %2 : vector<1x16xf32> to vector<2x16xf32>
    %292 = arith.addf %290, %291 : vector<2x16xf32>
    %293 = arith.negf %292 : vector<2x16xf32>
    %294 = math.exp %293 : vector<2x16xf32>
    %cst_47 = arith.constant 1.000000e+00 : f32
    %295 = vector.broadcast %cst_47 : f32 to vector<2x16xf32>
    %296 = arith.addf %295, %294 : vector<2x16xf32>
    %297 = arith.divf %295, %296 : vector<2x16xf32>
    %298 = math.tanh %292 : vector<2x16xf32>
    %299 = vector.extract_strided_slice %297 {offsets = [0, 0], sizes = [2, 4], strides = [1, 1]} : vector<2x16xf32> to vector<2x4xf32>
    %300 = vector.extract_strided_slice %297 {offsets = [0, 4], sizes = [2, 4], strides = [1, 1]} : vector<2x16xf32> to vector<2x4xf32>
    %301 = vector.extract_strided_slice %298 {offsets = [0, 8], sizes = [2, 4], strides = [1, 1]} : vector<2x16xf32> to vector<2x4xf32>
    %302 = vector.extract_strided_slice %297 {offsets = [0, 12], sizes = [2, 4], strides = [1, 1]} : vector<2x16xf32> to vector<2x4xf32>
    %303 = arith.mulf %300, %268 : vector<2x4xf32>
    %304 = arith.mulf %299, %301 : vector<2x4xf32>
    %305 = arith.addf %303, %304 : vector<2x4xf32>
    %306 = math.tanh %305 : vector<2x4xf32>
    %307 = arith.mulf %302, %306 : vector<2x4xf32>
    %308 = tpu.concatenate %48, %85, %122, %159, %196, %233, %270, %307 in 0 : vector<2x4xf32>, vector<2x4xf32>, vector<2x4xf32>, vector<2x4xf32>, vector<2x4xf32>, vector<2x4xf32>, vector<2x4xf32>, vector<2x4xf32> -> vector<16x4xf32>
    %cst_48 = arith.constant dense<0.000000e+00> : vector<16x1xf32>
    %309 = tpu.matmul %308, %3, %cst_48 {dimension_numbers = #tpu.dot_dimension_numbers<[1], [0], [0], [1], [0, 0, 1, 1], [], []>} : vector<16x4xf32>, vector<4x1xf32>, vector<16x1xf32> -> vector<16x1xf32>
    %310 = vector.broadcast %4 : vector<1x1xf32> to vector<16x1xf32>
    %311 = arith.addf %309, %310 : vector<16x1xf32>
    %c0_49 = arith.constant 0 : index
    %c0_50 = arith.constant 0 : index
    %312 = vector.load %arg8[%c0_49, %c0_50] : memref<16x1xf32, #tpu.memory_space<vmem>>, vector<16x1xf32>
    tpu.vector_store %arg8[%c0_49, %c0_50], %311 {strides = array<i32>} : memref<16x1xf32, #tpu.memory_space<vmem>>, vector<16x1xf32>,
    return
  }
}

</mosaic_0001>

<llo_original>
// kernel: lstm_forward.1
$region0: #{lstm_forward.1}
  #allocation0 [shape = 'u32[]', space=smem, size = 0x4, offset = 0x4, fixed_abs, tag = 'smem constant byte address 0x4 - core index']
  #allocation1 [shape = 'u32[144,128]{1,0:T(1,128)}', space=vmem, size = 0x12000, scoped, tag = 'internal scratch']
  #allocation2 [shape = 'f32[1,1]{1,0:T(1,128)S(1)}', space=vmem, size = 0x200, scoped, tag = 'scoped memory for lstm_forward.1']
  %s0 = inlined_call_operand.hbm [shape: f32[16,12], index: 0, kind: input, shape index: {}]
  %s1 = inlined_call_operand.vmem [shape: f32[12,16], index: 1, kind: input, shape index: {}]
  %s2 = inlined_call_operand.vmem [shape: f32[4,16], index: 2, kind: input, shape index: {}]
  %s3 = inlined_call_operand.vmem [shape: f32[1,16], index: 3, kind: input, shape index: {}]
  %s4 = inlined_call_operand.vmem [shape: f32[8,16], index: 4, kind: input, shape index: {}]
  %s5 = inlined_call_operand.vmem [shape: f32[1,16], index: 5, kind: input, shape index: {}]
  %s6 = inlined_call_operand.vmem [shape: f32[4,1], index: 6, kind: input, shape index: {}]
  %s7 = inlined_call_operand.<no memory space> [shape: f32[1,1], index: 7, kind: input, shape index: {}]
  %s8 = inlined_call_operand.vmem [shape: f32[16,1], index: 8, kind: output, shape index: {}]
  %s9 = sld [smem:[#allocation0]]
  $region46: #{lstm_forward.1} parent=0
    _
  %s11 = ssub.s32 1, %s9
  %s12 = scalar_select 0, %s11, %s9
  %v13 = vstv %s7
  %14 = vst [vmem:[#allocation2] sm:$0x1] %v13
  $region1: #{lstm_forward.1} parent=0
    #allocation3 [shape = 'u8[8192]{0}', space=vmem, size = 0x2000, scoped, tag = 'input window, operand 0, single buffered']
    #allocation4 [shape = 's32[1]{0}', space=sflag, size = 0x4, scoped, tag = 'scoped memory for lstm_forward.1']
    %15 = vsyncpa [#allocation4], 0
    // Predicated region
    $region2: #{lstm_forward.1} parent=1 // pred_check
      _
    $region3: #{lstm_forward.1} parent=1 // pred_check_branch
      %17 = sbr.rel (0) target = $region5
    $region4: #{lstm_forward.1} parent=1 // pred_region
      %s19 = ssub.s32 256, 256
      %20 = vsyncadd [#allocation4], %s19
      %s21 = sshll.u32 [#allocation3], 4
      %s22 = int_to_ptr.vmem [resolvable:$true] %s21
      %27 = dma.hbm_to_vmem [thread:$0]  %s0, 256, %s22, [#allocation4], 128, 128, 8
    $region5: #{lstm_forward.1} parent=1 // pred_fallthru
      _
    // Predicated region
    $region6: #{lstm_forward.1} parent=1 // pred_check
      _
    $region7: #{lstm_forward.1} parent=1 // pred_check_branch
      %29 = sbr.rel (0) target = $region9
    $region8: #{lstm_forward.1} parent=1 // pred_region
      _
    $region9: #{lstm_forward.1} parent=1 // pred_fallthru
      _
    // Predicated region
    $region10: #{lstm_forward.1} parent=1 // pred_check
      _
    $region11: #{lstm_forward.1} parent=1 // pred_check_branch
      %31 = sbr.rel (0) target = $region13
    $region12: #{lstm_forward.1} parent=1 // pred_region
      _
    $region13: #{lstm_forward.1} parent=1 // pred_fallthru
      _
    // Predicated region
    $region14: #{lstm_forward.1} parent=1 // pred_check
      _
    $region15: #{lstm_forward.1} parent=1 // pred_check_branch
      %33 = sbr.rel (0) target = $region17
    $region16: #{lstm_forward.1} parent=1 // pred_region
      _
    $region17: #{lstm_forward.1} parent=1 // pred_fallthru
      _
    // Predicated region
    $region18: #{lstm_forward.1} parent=1 // pred_check
      _
    $region19: #{lstm_forward.1} parent=1 // pred_check_branch
      %35 = sbr.rel (0) target = $region21
    $region20: #{lstm_forward.1} parent=1 // pred_region
      _
    $region21: #{lstm_forward.1} parent=1 // pred_fallthru
      _
    // Predicated region
    $region22: #{lstm_forward.1} parent=1 // pred_check
      _
    $region23: #{lstm_forward.1} parent=1 // pred_check_branch
      %37 = sbr.rel (0) target = $region25
    $region24: #{lstm_forward.1} parent=1 // pred_region
      _
    $region25: #{lstm_forward.1} parent=1 // pred_fallthru
      _
    // Predicated region
    $region26: #{lstm_forward.1} parent=1 // pred_check
      _
    $region27: #{lstm_forward.1} parent=1 // pred_check_branch
      %39 = sbr.rel (0) target = $region29
    $region28: #{lstm_forward.1} parent=1 // pred_region
      _
    $region29: #{lstm_forward.1} parent=1 // pred_fallthru
      _
    // Predicated region
    $region30: #{lstm_forward.1} parent=1 // pred_check
      _
    $region31: #{lstm_forward.1} parent=1 // pred_check_branch
      %41 = sbr.rel (0) target = $region33
    $region32: #{lstm_forward.1} parent=1 // pred_region
      _
    $region33: #{lstm_forward.1} parent=1 // pred_fallthru
      _
    // Predicated region
    $region34: #{lstm_forward.1} parent=1 // pred_check
      _
    $region35: #{lstm_forward.1} parent=1 // pred_check_branch
      %43 = sbr.rel (0) target = $region37
    $region36: #{lstm_forward.1} parent=1 // pred_region
      %44 = dma.done [#allocation4], 256
    $region37: #{lstm_forward.1} parent=1 // pred_fallthru
      _
    %v45 = vld [vmem:[%s2] sm:$0xf]
    %v46 = vld [vmem:[%s4] sm:$0xff]
    %v47 = vld [vmem:[%s5] sm:$0x1]
    %v48 = vld [vmem:[%s6] sm:$0xf]
    %v49 = vld [vmem:[#allocation2] sm:$0x1]
    %v50 = vld [vmem:[#allocation3] sm:$0xff]
    %v51 = vld [vmem:[#allocation3 + $0x8] sm:$0xff]
    %v52 = vld [vmem:[%s1] sm:$0xff]
    %v53 = vld [vmem:[%s1 + $0x8] sm:$0xf]
    %v54 = vld [vmem:[%s3] sm:$0x1]
    %v56 = vlaneseq
    %v57 = vshrl.u32 %v56, 7
    %v58 = vsub.s32 0, %v57
    %v59 = vrot.slane %v54, %v58
    %vm61 = vcmask 97280
    %v63 = vsel %vm61, %v50, 0
    %v66 = vsel %vm61, %v51, 0
    %vm68 = vcmask 1043456
    %v70 = vsel %vm68, %v53, 0
    %72 = vmatprep.subr.mxu0 0.0
    %73 = vmatpush1.msra.mxu0 %v52
    %74 = vmatprep.subr.mxu0 0.0
    %75 = vmatpush1.msra.mxu0 %v70
    %76 = vmatprep.subr.mxu0 0.0
    %77 = vmatpush1.msra.mxu0 0.0
    %78 = vmatprep.subr.mxu0 0.0
    %79 = vmatpush1.msra.mxu0 0.0
    %80 = vmatprep.subr.mxu0 0.0
    %81 = vmatpush1.msra.mxu0 0.0
    %82 = vmatprep.subr.mxu0 0.0
    %83 = vmatpush1.msra.mxu0 0.0
    %84 = vmatprep.subr.mxu0 0.0
    %85 = vmatpush1.msra.mxu0 0.0
    %86 = vmatprep.subr.mxu0 0.0
    %87 = vmatpush1.msra.mxu0 0.0
    %88 = vmatprep.subr.mxu0 0.0
    %89 = vmatpush1.msra.mxu0 0.0
    %90 = vmatprep.subr.mxu0 0.0
    %91 = vmatpush1.msra.mxu0 0.0
    %92 = vmatprep.subr.mxu0 0.0
    %93 = vmatpush1.msra.mxu0 0.0
    %94 = vmatprep.subr.mxu0 0.0
    %95 = vmatpush1.msra.mxu0 0.0
    %96 = vmatprep.subr.mxu0 0.0
    %97 = vmatpush1.msra.mxu0 0.0
    %98 = vmatprep.subr.mxu0 0.0
    %99 = vmatpush1.msra.mxu0 0.0
    %100 = vmatprep.subr.mxu0 0.0
    %101 = vmatpush1.msra.mxu0 0.0
    %102 = vmatprep.subr.mxu0 0.0
    %103 = vmatpush1.msra.mxu0 0.0
    %104 = vmatprep.subr.mxu0 0.0
    %105 = vmatpush1.msra.mxu0 0.0
    %106 = vmatprep.subr.mxu0 0.0
    %107 = vmatpush1.msra.mxu0 0.0
    %108 = vmatprep.subr.mxu0 0.0
    %109 = vmatpush1.msra.mxu0 0.0
    %110 = vmatprep.subr.mxu0 0.0
    %111 = vmatpush1.msra.mxu0 0.0
    %112 = vmatprep.subr.mxu0 0.0
    %113 = vmatpush1.msra.mxu0 0.0
    %114 = vmatprep.subr.mxu0 0.0
    %115 = vmatpush1.msra.mxu0 0.0
    %116 = vmatprep.subr.mxu0 0.0
    %117 = vmatpush1.msra.mxu0 0.0
    %118 = vmatprep.subr.mxu0 0.0
    %119 = vmatpush1.msra.mxu0 0.0
    %120 = vmatprep.subr.mxu0 0.0
    %121 = vmatpush1.msra.mxu0 0.0
    %122 = vmatprep.subr.mxu0 0.0
    %123 = vmatpush1.msra.mxu0 0.0
    %124 = vmatprep.subr.mxu0 0.0
    %125 = vmatpush1.msra.mxu0 0.0
    %126 = vmatprep.subr.mxu0 0.0
    %127 = vmatpush1.msra.mxu0 0.0
    %128 = vmatprep.subr.mxu0 0.0
    %129 = vmatpush1.msra.mxu0 0.0
    %130 = vmatprep.subr.mxu0 0.0
    %131 = vmatpush1.msra.mxu0 0.0
    %132 = vmatprep.subr.mxu0 0.0
    %133 = vmatpush1.msra.mxu0 0.0
    %134 = vmatprep.subr.mxu0 0.0
    %135 = vmatpush1.msra.mxu0 0.0
    %136 = vmatprep.mubr.f32.mxu0 0.0
    %137 = vmatmul.mubr.f32.gmra.mrb[0].mxu0 %v63
    %v138 = vpop.f32.mrb[0].mxu0
    %v139 = vadd.f32 %v59, %v138
    %v140 = vpop.f32.mrb[0].mxu0
    %141 = vmatprep.mubr.f32.mxu0 0.0
    %142 = vmatmul.mubr.f32.gmra.mrb[0].mxu0 %v66
    %v143 = vpop.f32.mrb[0].mxu0
    %v144 = vadd.f32 %v59, %v143
    %v145 = vpop.f32.mrb[0].mxu0
    %146 = vdwg.mxu0
    %vm147 = vcmask 31744
    %v149 = vsel %vm147, 0.0, 0
    %v152 = vsel %vm68, %v45, 0
    %154 = vmatprep.subr.mxu0 0.0
    %155 = vmatpush1.msra.mxu0 %v152
    %156 = vmatprep.subr.mxu0 0.0
    %157 = vmatpush1.msra.mxu0 0.0
    %158 = vmatprep.subr.mxu0 0.0
    %159 = vmatpush1.msra.mxu0 0.0
    %160 = vmatprep.subr.mxu0 0.0
    %161 = vmatpush1.msra.mxu0 0.0
    %162 = vmatprep.subr.mxu0 0.0
    %163 = vmatpush1.msra.mxu0 0.0
    %164 = vmatprep.subr.mxu0 0.0
    %165 = vmatpush1.msra.mxu0 0.0
    %166 = vmatprep.subr.mxu0 0.0
    %167 = vmatpush1.msra.mxu0 0.0
    %168 = vmatprep.subr.mxu0 0.0
    %169 = vmatpush1.msra.mxu0 0.0
    %170 = vmatprep.subr.mxu0 0.0
    %171 = vmatpush1.msra.mxu0 0.0
    %172 = vmatprep.subr.mxu0 0.0
    %173 = vmatpush1.msra.mxu0 0.0
    %174 = vmatprep.subr.mxu0 0.0
    %175 = vmatpush1.msra.mxu0 0.0
    %176 = vmatprep.subr.mxu0 0.0
    %177 = vmatpush1.msra.mxu0 0.0
    %178 = vmatprep.subr.mxu0 0.0
    %179 = vmatpush1.msra.mxu0 0.0
    %180 = vmatprep.subr.mxu0 0.0
    %181 = vmatpush1.msra.mxu0 0.0
    %182 = vmatprep.subr.mxu0 0.0
    %183 = vmatpush1.msra.mxu0 0.0
    %184 = vmatprep.subr.mxu0 0.0
    %185 = vmatpush1.msra.mxu0 0.0
    %186 = vmatprep.subr.mxu0 0.0
    %187 = vmatpush1.msra.mxu0 0.0
    %188 = vmatprep.subr.mxu0 0.0
    %189 = vmatpush1.msra.mxu0 0.0
    %190 = vmatprep.subr.mxu0 0.0
    %191 = vmatpush1.msra.mxu0 0.0
    %192 = vmatprep.subr.mxu0 0.0
    %193 = vmatpush1.msra.mxu0 0.0
    %194 = vmatprep.subr.mxu0 0.0
    %195 = vmatpush1.msra.mxu0 0.0
    %196 = vmatprep.subr.mxu0 0.0
    %197 = vmatpush1.msra.mxu0 0.0
    %198 = vmatprep.subr.mxu0 0.0
    %199 = vmatpush1.msra.mxu0 0.0
    %200 = vmatprep.subr.mxu0 0.0
    %201 = vmatpush1.msra.mxu0 0.0
    %202 = vmatprep.subr.mxu0 0.0
    %203 = vmatpush1.msra.mxu0 0.0
    %204 = vmatprep.subr.mxu0 0.0
    %205 = vmatpush1.msra.mxu0 0.0
    %206 = vmatprep.subr.mxu0 0.0
    %207 = vmatpush1.msra.mxu0 0.0
    %208 = vmatprep.subr.mxu0 0.0
    %209 = vmatpush1.msra.mxu0 0.0
    %210 = vmatprep.subr.mxu0 0.0
    %211 = vmatpush1.msra.mxu0 0.0
    %212 = vmatprep.subr.mxu0 0.0
    %213 = vmatpush1.msra.mxu0 0.0
    %214 = vmatprep.subr.mxu0 0.0
    %215 = vmatpush1.msra.mxu0 0.0
    %216 = vmatprep.subr.mxu0 0.0
    %217 = vmatpush1.msra.mxu0 0.0
    %218 = vmatprep.mubr.f32.mxu0 0.0
    %219 = vmatmul.mubr.f32.gmra.mrb[0].mxu0 %v149
    %v220 = vpop.f32.mrb[0].mxu0
    %v221 = vadd.f32 0.0, %v220
    %v222 = vpop.f32.mrb[0].mxu0
    %223 = vdwg.mxu0
    %v224 = vadd.f32 %v139, %v221
    %v225 = vxor.u32 %v224, 2147483648
    %v226 = vmul.f32 %v225, 1.442695
    %v227 = vpow.pop %v226
    %v228 = vadd.f32 %v227, 1.0
    %v229 = vrcp.pop %v228
    %v230 = vmul.f32 1.0, %v229
    %v231 = vtanh.pop %v224
    %v232 = vmul.f32 %v230, 0.0
    %234 = vrot.lane.b32.xlu0 %v231, 120
    %v235 = vpop.permute.xlu0 %234
    %v237 = vmul.f32 %v230, %v235
    %239 = vrot.lane.b32.xlu0 %v237, 4
    %v240 = vpop.permute.xlu0 %239
    %v242 = vadd.f32 %v232, %v240
    %v243 = vtanh.pop %v242
    %245 = vrot.lane.b32.xlu0 %v243, 8
    %v246 = vpop.permute.xlu0 %245
    %v248 = vmul.f32 %v230, %v246
    %250 = vrot.lane.b32.xlu0 %v248, 116
    %v251 = vpop.permute.xlu0 %250
    %v253 = vsel %vm147, %v251, 0.0
    %v255 = vlaneseq
    %v256 = vshrl.u32 %v255, 7
    %v257 = vsub.s32 0, %v256
    %v258 = vrot.slane %v47, %v257
    %vm260 = vcmask 64512
    %v262 = vsel %vm260, %v253, 0
    %264 = vmatprep.subr.mxu0 0.0
    %265 = vmatpush1.msra.mxu0 %v46
    %266 = vmatprep.subr.mxu0 0.0
    %267 = vmatpush1.msra.mxu0 0.0
    %268 = vmatprep.subr.mxu0 0.0
    %269 = vmatpush1.msra.mxu0 0.0
    %270 = vmatprep.subr.mxu0 0.0
    %271 = vmatpush1.msra.mxu0 0.0
    %272 = vmatprep.subr.mxu0 0.0
    %273 = vmatpush1.msra.mxu0 0.0
    %274 = vmatprep.subr.mxu0 0.0
    %275 = vmatpush1.msra.mxu0 0.0
    %276 = vmatprep.subr.mxu0 0.0
    %277 = vmatpush1.msra.mxu0 0.0
    %278 = vmatprep.subr.mxu0 0.0
    %279 = vmatpush1.msra.mxu0 0.0
    %280 = vmatprep.subr.mxu0 0.0
    %281 = vmatpush1.msra.mxu0 0.0
    %282 = vmatprep.subr.mxu0 0.0
    %283 = vmatpush1.msra.mxu0 0.0
    %284 = vmatprep.subr.mxu0 0.0
    %285 = vmatpush1.msra.mxu0 0.0
    %286 = vmatprep.subr.mxu0 0.0
    %287 = vmatpush1.msra.mxu0 0.0
    %288 = vmatprep.subr.mxu0 0.0
    %289 = vmatpush1.msra.mxu0 0.0
    %290 = vmatprep.subr.mxu0 0.0
    %291 = vmatpush1.msra.mxu0 0.0
    %292 = vmatprep.subr.mxu0 0.0
    %293 = vmatpush1.msra.mxu0 0.0
    %294 = vmatprep.subr.mxu0 0.0
    %295 = vmatpush1.msra.mxu0 0.0
    %296 = vmatprep.subr.mxu0 0.0
    %297 = vmatpush1.msra.mxu0 0.0
    %298 = vmatprep.subr.mxu0 0.0
    %299 = vmatpush1.msra.mxu0 0.0
    %300 = vmatprep.subr.mxu0 0.0
    %301 = vmatpush1.msra.mxu0 0.0
    %302 = vmatprep.subr.mxu0 0.0
    %303 = vmatpush1.msra.mxu0 0.0
    %304 = vmatprep.subr.mxu0 0.0
    %305 = vmatpush1.msra.mxu0 0.0
    %306 = vmatprep.subr.mxu0 0.0
    %307 = vmatpush1.msra.mxu0 0.0
    %308 = vmatprep.subr.mxu0 0.0
    %309 = vmatpush1.msra.mxu0 0.0
    %310 = vmatprep.subr.mxu0 0.0
    %311 = vmatpush1.msra.mxu0 0.0
    %312 = vmatprep.subr.mxu0 0.0
    %313 = vmatpush1.msra.mxu0 0.0
    %314 = vmatprep.subr.mxu0 0.0
    %315 = vmatpush1.msra.mxu0 0.0
    %316 = vmatprep.subr.mxu0 0.0
    %317 = vmatpush1.msra.mxu0 0.0
    %318 = vmatprep.subr.mxu0 0.0
    %319 = vmatpush1.msra.mxu0 0.0
    %320 = vmatprep.subr.mxu0 0.0
    %321 = vmatpush1.msra.mxu0 0.0
    %322 = vmatprep.subr.mxu0 0.0
    %323 = vmatpush1.msra.mxu0 0.0
    %324 = vmatprep.subr.mxu0 0.0
    %325 = vmatpush1.msra.mxu0 0.0
    %326 = vmatprep.subr.mxu0 0.0
    %327 = vmatpush1.msra.mxu0 0.0
    %328 = vmatprep.mubr.f32.mxu0 0.0
    %329 = vmatmul.mubr.f32.gmra.mrb[0].mxu0 %v262
    %v330 = vpop.f32.mrb[0].mxu0
    %v331 = vadd.f32 %v258, %v330
    %v332 = vpop.f32.mrb[0].mxu0
    %333 = vdwg.mxu0
    %v334 = vxor.u32 %v331, 2147483648
    %v335 = vmul.f32 %v334, 1.442695
    %v336 = vpow.pop %v335
    %v337 = vadd.f32 %v336, 1.0
    %v338 = vrcp.pop %v337
    %v339 = vmul.f32 1.0, %v338
    %v340 = vtanh.pop %v331
    %v341 = vmul.f32 %v339, 0.0
    %343 = vrot.lane.b32.xlu0 %v340, 120
    %v344 = vpop.permute.xlu0 %343
    %v346 = vmul.f32 %v339, %v344
    %348 = vrot.lane.b32.xlu0 %v346, 4
    %v349 = vpop.permute.xlu0 %348
    %v351 = vadd.f32 %v341, %v349
    %v352 = vtanh.pop %v351
    %354 = vrot.lane.b32.xlu0 %v352, 8
    %v355 = vpop.permute.xlu0 %354
    %v357 = vmul.f32 %v339, %v355
    %v358 = vsel %vm147, %v251, 0
    %360 = vmatprep.subr.mxu0 0.0
    %361 = vmatpush1.msra.mxu0 %v152
    %362 = vmatprep.subr.mxu0 0.0
    %363 = vmatpush1.msra.mxu0 0.0
    %364 = vmatprep.subr.mxu0 0.0
    %365 = vmatpush1.msra.mxu0 0.0
    %366 = vmatprep.subr.mxu0 0.0
    %367 = vmatpush1.msra.mxu0 0.0
    %368 = vmatprep.subr.mxu0 0.0
    %369 = vmatpush1.msra.mxu0 0.0
    %370 = vmatprep.subr.mxu0 0.0
    %371 = vmatpush1.msra.mxu0 0.0
    %372 = vmatprep.subr.mxu0 0.0
    %373 = vmatpush1.msra.mxu0 0.0
    %374 = vmatprep.subr.mxu0 0.0
    %375 = vmatpush1.msra.mxu0 0.0
    %376 = vmatprep.subr.mxu0 0.0
    %377 = vmatpush1.msra.mxu0 0.0
    %378 = vmatprep.subr.mxu0 0.0
    %379 = vmatpush1.msra.mxu0 0.0
    %380 = vmatprep.subr.mxu0 0.0
    %381 = vmatpush1.msra.mxu0 0.0
    %382 = vmatprep.subr.mxu0 0.0
    %383 = vmatpush1.msra.mxu0 0.0
    %384 = vmatprep.subr.mxu0 0.0
    %385 = vmatpush1.msra.mxu0 0.0
    %386 = vmatprep.subr.mxu0 0.0
    %387 = vmatpush1.msra.mxu0 0.0
    %388 = vmatprep.subr.mxu0 0.0
    %389 = vmatpush1.msra.mxu0 0.0
    %390 = vmatprep.subr.mxu0 0.0
    %391 = vmatpush1.msra.mxu0 0.0
    %392 = vmatprep.subr.mxu0 0.0
    %393 = vmatpush1.msra.mxu0 0.0
    %394 = vmatprep.subr.mxu0 0.0
    %395 = vmatpush1.msra.mxu0 0.0
    %396 = vmatprep.subr.mxu0 0.0
    %397 = vmatpush1.msra.mxu0 0.0
    %398 = vmatprep.subr.mxu0 0.0
    %399 = vmatpush1.msra.mxu0 0.0
    %400 = vmatprep.subr.mxu0 0.0
    %401 = vmatpush1.msra.mxu0 0.0
    %402 = vmatprep.subr.mxu0 0.0
    %403 = vmatpush1.msra.mxu0 0.0
    %404 = vmatprep.subr.mxu0 0.0
    %405 = vmatpush1.msra.mxu0 0.0
    %406 = vmatprep.subr.mxu0 0.0
    %407 = vmatpush1.msra.mxu0 0.0
    %408 = vmatprep.subr.mxu0 0.0
    %409 = vmatpush1.msra.mxu0 0.0
    %410 = vmatprep.subr.mxu0 0.0
    %411 = vmatpush1.msra.mxu0 0.0
    %412 = vmatprep.subr.mxu0 0.0
    %413 = vmatpush1.msra.mxu0 0.0
    %414 = vmatprep.subr.mxu0 0.0
    %415 = vmatpush1.msra.mxu0 0.0
    %416 = vmatprep.subr.mxu0 0.0
    %417 = vmatpush1.msra.mxu0 0.0
    %418 = vmatprep.subr.mxu0 0.0
    %419 = vmatpush1.msra.mxu0 0.0
    %420 = vmatprep.subr.mxu0 0.0
    %421 = vmatpush1.msra.mxu0 0.0
    %422 = vmatprep.subr.mxu0 0.0
    %423 = vmatpush1.msra.mxu0 0.0
    %424 = vmatprep.mubr.f32.mxu0 0.0
    %425 = vmatmul.mubr.f32.gmra.mrb[0].mxu0 %v358
    %v426 = vpop.f32.mrb[0].mxu0
    %v427 = vadd.f32 0.0, %v426
    %v428 = vpop.f32.mrb[0].mxu0
    %429 = vdwg.mxu0
    %v431 = vrot.slane %v427, 6
    %v433 = vadd.f32 %v139, %v431
    %v434 = vxor.u32 %v433, 2147483648
    %v435 = vmul.f32 %v434, 1.442695
    %v436 = vpow.pop %v435
    %v437 = vadd.f32 %v436, 1.0
    %v438 = vrcp.pop %v437
    %v439 = vmul.f32 1.0, %v438
    %v440 = vtanh.pop %v433
    %v442 = vrot.slane %v242, 6
    %v444 = vmul.f32 %v439, %v442
    %446 = vrot.lane.b32.xlu0 %v440, 120
    %v447 = vpop.permute.xlu0 %446
    %v449 = vmul.f32 %v439, %v447
    %451 = vrot.lane.b32.xlu0 %v449, 4
    %v452 = vpop.permute.xlu0 %451
    %v454 = vadd.f32 %v444, %v452
    %v455 = vtanh.pop %v454
    %457 = vrot.lane.b32.xlu0 %v455, 8
    %v458 = vpop.permute.xlu0 %457
    %v460 = vmul.f32 %v439, %v458
    %462 = vrot.lane.b32.xlu0 %v460, 116
    %v463 = vpop.permute.xlu0 %462
    %v466 = vrot.slane %v357, 6
    %467 = vrot.lane.b32.xlu0 %v466, 120
    %v468 = vpop.permute.xlu0 %467
    %v470 = vsel %vm147, %v463, %v468
    %v472 = vrot.slane %v470, 2
    %v473 = vsel %vm260, %v472, 0
    %475 = vmatprep.subr.mxu0 0.0
    %476 = vmatpush1.msra.mxu0 %v46
    %477 = vmatprep.subr.mxu0 0.0
    %478 = vmatpush1.msra.mxu0 0.0
    %479 = vmatprep.subr.mxu0 0.0
    %480 = vmatpush1.msra.mxu0 0.0
    %481 = vmatprep.subr.mxu0 0.0
    %482 = vmatpush1.msra.mxu0 0.0
    %483 = vmatprep.subr.mxu0 0.0
    %484 = vmatpush1.msra.mxu0 0.0
    %485 = vmatprep.subr.mxu0 0.0
    %486 = vmatpush1.msra.mxu0 0.0
    %487 = vmatprep.subr.mxu0 0.0
    %488 = vmatpush1.msra.mxu0 0.0
    %489 = vmatprep.subr.mxu0 0.0
    %490 = vmatpush1.msra.mxu0 0.0
    %491 = vmatprep.subr.mxu0 0.0
    %492 = vmatpush1.msra.mxu0 0.0
    %493 = vmatprep.subr.mxu0 0.0
    %494 = vmatpush1.msra.mxu0 0.0
    %495 = vmatprep.subr.mxu0 0.0
    %496 = vmatpush1.msra.mxu0 0.0
    %497 = vmatprep.subr.mxu0 0.0
    %498 = vmatpush1.msra.mxu0 0.0
    %499 = vmatprep.subr.mxu0 0.0
    %500 = vmatpush1.msra.mxu0 0.0
    %501 = vmatprep.subr.mxu0 0.0
    %502 = vmatpush1.msra.mxu0 0.0
    %503 = vmatprep.subr.mxu0 0.0
    %504 = vmatpush1.msra.mxu0 0.0
    %505 = vmatprep.subr.mxu0 0.0
    %506 = vmatpush1.msra.mxu0 0.0
    %507 = vmatprep.subr.mxu0 0.0
    %508 = vmatpush1.msra.mxu0 0.0
    %509 = vmatprep.subr.mxu0 0.0
    %510 = vmatpush1.msra.mxu0 0.0
    %511 = vmatprep.subr.mxu0 0.0
    %512 = vmatpush1.msra.mxu0 0.0
    %513 = vmatprep.subr.mxu0 0.0
    %514 = vmatpush1.msra.mxu0 0.0
    %515 = vmatprep.subr.mxu0 0.0
    %516 = vmatpush1.msra.mxu0 0.0
    %517 = vmatprep.subr.mxu0 0.0
    %518 = vmatpush1.msra.mxu0 0.0
    %519 = vmatprep.subr.mxu0 0.0
    %520 = vmatpush1.msra.mxu0 0.0
    %521 = vmatprep.subr.mxu0 0.0
    %522 = vmatpush1.msra.mxu0 0.0
    %523 = vmatprep.subr.mxu0 0.0
    %524 = vmatpush1.msra.mxu0 0.0
    %525 = vmatprep.subr.mxu0 0.0
    %526 = vmatpush1.msra.mxu0 0.0
    %527 = vmatprep.subr.mxu0 0.0
    %528 = vmatpush1.msra.mxu0 0.0
    %529 = vmatprep.subr.mxu0 0.0
    %530 = vmatpush1.msra.mxu0 0.0
    %531 = vmatprep.subr.mxu0 0.0
    %532 = vmatpush1.msra.mxu0 0.0
    %533 = vmatprep.subr.mxu0 0.0
    %534 = vmatpush1.msra.mxu0 0.0
    %535 = vmatprep.subr.mxu0 0.0
    %536 = vmatpush1.msra.mxu0 0.0
    %537 = vmatprep.subr.mxu0 0.0
    %538 = vmatpush1.msra.mxu0 0.0
    %539 = vmatprep.mubr.f32.mxu0 0.0
    %540 = vmatmul.mubr.f32.gmra.mrb[0].mxu0 %v473
    %v541 = vpop.f32.mrb[0].mxu0
    %v542 = vadd.f32 %v258, %v541
    %v543 = vpop.f32.mrb[0].mxu0
    %544 = vdwg.mxu0
    %v545 = vxor.u32 %v542, 2147483648
    %v546 = vmul.f32 %v545, 1.442695
    %v547 = vpow.pop %v546
    %v548 = vadd.f32 %v547, 1.0
    %v549 = vrcp.pop %v548
    %v550 = vmul.f32 1.0, %v549
    %v551 = vtanh.pop %v542
    %v552 = vmul.f32 %v550, %v351
    %554 = vrot.lane.b32.xlu0 %v551, 120
    %v555 = vpop.permute.xlu0 %554
    %v557 = vmul.f32 %v550, %v555
    %559 = vrot.lane.b32.xlu0 %v557, 4
    %v560 = vpop.permute.xlu0 %559
    %v562 = vadd.f32 %v552, %v560
    %v563 = vtanh.pop %v562
    %565 = vrot.lane.b32.xlu0 %v563, 8
    %v566 = vpop.permute.xlu0 %565
    %v568 = vmul.f32 %v550, %v566
    %v569 = vrot.slane %v460, 2
    %570 = vrot.lane.b32.xlu0 %v569, 116
    %v571 = vpop.permute.xlu0 %570
    %v572 = vsel %vm147, %v571, 0
    %574 = vmatprep.subr.mxu0 0.0
    %575 = vmatpush1.msra.mxu0 %v152
    %576 = vmatprep.subr.mxu0 0.0
    %577 = vmatpush1.msra.mxu0 0.0
    %578 = vmatprep.subr.mxu0 0.0
    %579 = vmatpush1.msra.mxu0 0.0
    %580 = vmatprep.subr.mxu0 0.0
    %581 = vmatpush1.msra.mxu0 0.0
    %582 = vmatprep.subr.mxu0 0.0
    %583 = vmatpush1.msra.mxu0 0.0
    %584 = vmatprep.subr.mxu0 0.0
    %585 = vmatpush1.msra.mxu0 0.0
    %586 = vmatprep.subr.mxu0 0.0
    %587 = vmatpush1.msra.mxu0 0.0
    %588 = vmatprep.subr.mxu0 0.0
    %589 = vmatpush1.msra.mxu0 0.0
    %590 = vmatprep.subr.mxu0 0.0
    %591 = vmatpush1.msra.mxu0 0.0
    %592 = vmatprep.subr.mxu0 0.0
    %593 = vmatpush1.msra.mxu0 0.0
    %594 = vmatprep.subr.mxu0 0.0
    %595 = vmatpush1.msra.mxu0 0.0
    %596 = vmatprep.subr.mxu0 0.0
    %597 = vmatpush1.msra.mxu0 0.0
    %598 = vmatprep.subr.mxu0 0.0
    %599 = vmatpush1.msra.mxu0 0.0
    %600 = vmatprep.subr.mxu0 0.0
    %601 = vmatpush1.msra.mxu0 0.0
    %602 = vmatprep.subr.mxu0 0.0
    %603 = vmatpush1.msra.mxu0 0.0
    %604 = vmatprep.subr.mxu0 0.0
    %605 = vmatpush1.msra.mxu0 0.0
    %606 = vmatprep.subr.mxu0 0.0
    %607 = vmatpush1.msra.mxu0 0.0
    %608 = vmatprep.subr.mxu0 0.0
    %609 = vmatpush1.msra.mxu0 0.0
    %610 = vmatprep.subr.mxu0 0.0
    %611 = vmatpush1.msra.mxu0 0.0
    %612 = vmatprep.subr.mxu0 0.0
    %613 = vmatpush1.msra.mxu0 0.0
    %614 = vmatprep.subr.mxu0 0.0
    %615 = vmatpush1.msra.mxu0 0.0
    %616 = vmatprep.subr.mxu0 0.0
    %617 = vmatpush1.msra.mxu0 0.0
    %618 = vmatprep.subr.mxu0 0.0
    %619 = vmatpush1.msra.mxu0 0.0
    %620 = vmatprep.subr.mxu0 0.0
    %621 = vmatpush1.msra.mxu0 0.0
    %622 = vmatprep.subr.mxu0 0.0
    %623 = vmatpush1.msra.mxu0 0.0
    %624 = vmatprep.subr.mxu0 0.0
    %625 = vmatpush1.msra.mxu0 0.0
    %626 = vmatprep.subr.mxu0 0.0
    %627 = vmatpush1.msra.mxu0 0.0
    %628 = vmatprep.subr.mxu0 0.0
    %629 = vmatpush1.msra.mxu0 0.0
    %630 = vmatprep.subr.mxu0 0.0
    %631 = vmatpush1.msra.mxu0 0.0
    %632 = vmatprep.subr.mxu0 0.0
    %633 = vmatpush1.msra.mxu0 0.0
    %634 = vmatprep.subr.mxu0 0.0
    %635 = vmatpush1.msra.mxu0 0.0
    %636 = vmatprep.subr.mxu0 0.0
    %637 = vmatpush1.msra.mxu0 0.0
    %638 = vmatprep.mubr.f32.mxu0 0.0
    %639 = vmatmul.mubr.f32.gmra.mrb[0].mxu0 %v572
    %v640 = vpop.f32.mrb[0].mxu0
    %v641 = vadd.f32 0.0, %v640
    %v642 = vpop.f32.mrb[0].mxu0
    %643 = vdwg.mxu0
    %v645 = vrot.slane %v641, 4
    %v647 = vadd.f32 %v139, %v645
    %v648 = vxor.u32 %v647, 2147483648
    %v649 = vmul.f32 %v648, 1.442695
    %v650 = vpow.pop %v649
    %v651 = vadd.f32 %v650, 1.0
    %v652 = vrcp.pop %v651
    %v653 = vmul.f32 1.0, %v652
    %v654 = vtanh.pop %v647
    %v656 = vrot.slane %v454, 6
    %v658 = vmul.f32 %v653, %v656
    %660 = vrot.lane.b32.xlu0 %v654, 120
    %v661 = vpop.permute.xlu0 %660
    %v663 = vmul.f32 %v653, %v661
    %665 = vrot.lane.b32.xlu0 %v663, 4
    %v666 = vpop.permute.xlu0 %665
    %v668 = vadd.f32 %v658, %v666
    %v669 = vtanh.pop %v668
    %671 = vrot.lane.b32.xlu0 %v669, 8
    %v672 = vpop.permute.xlu0 %671
    %v674 = vmul.f32 %v653, %v672
    %676 = vrot.lane.b32.xlu0 %v674, 116
    %v677 = vpop.permute.xlu0 %676
    %v680 = vrot.slane %v568, 4
    %681 = vrot.lane.b32.xlu0 %v680, 120
    %v682 = vpop.permute.xlu0 %681
    %v684 = vsel %vm147, %v677, %v682
    %v686 = vrot.slane %v684, 4
    %v687 = vsel %vm260, %v686, 0
    %689 = vmatprep.subr.mxu0 0.0
    %690 = vmatpush1.msra.mxu0 %v46
    %691 = vmatprep.subr.mxu0 0.0
    %692 = vmatpush1.msra.mxu0 0.0
    %693 = vmatprep.subr.mxu0 0.0
    %694 = vmatpush1.msra.mxu0 0.0
    %695 = vmatprep.subr.mxu0 0.0
    %696 = vmatpush1.msra.mxu0 0.0
    %697 = vmatprep.subr.mxu0 0.0
    %698 = vmatpush1.msra.mxu0 0.0
    %699 = vmatprep.subr.mxu0 0.0
    %700 = vmatpush1.msra.mxu0 0.0
    %701 = vmatprep.subr.mxu0 0.0
    %702 = vmatpush1.msra.mxu0 0.0
    %703 = vmatprep.subr.mxu0 0.0
    %704 = vmatpush1.msra.mxu0 0.0
    %705 = vmatprep.subr.mxu0 0.0
    %706 = vmatpush1.msra.mxu0 0.0
    %707 = vmatprep.subr.mxu0 0.0
    %708 = vmatpush1.msra.mxu0 0.0
    %709 = vmatprep.subr.mxu0 0.0
    %710 = vmatpush1.msra.mxu0 0.0
    %711 = vmatprep.subr.mxu0 0.0
    %712 = vmatpush1.msra.mxu0 0.0
    %713 = vmatprep.subr.mxu0 0.0
    %714 = vmatpush1.msra.mxu0 0.0
    %715 = vmatprep.subr.mxu0 0.0
    %716 = vmatpush1.msra.mxu0 0.0
    %717 = vmatprep.subr.mxu0 0.0
    %718 = vmatpush1.msra.mxu0 0.0
    %719 = vmatprep.subr.mxu0 0.0
    %720 = vmatpush1.msra.mxu0 0.0
    %721 = vmatprep.subr.mxu0 0.0
    %722 = vmatpush1.msra.mxu0 0.0
    %723 = vmatprep.subr.mxu0 0.0
    %724 = vmatpush1.msra.mxu0 0.0
    %725 = vmatprep.subr.mxu0 0.0
    %726 = vmatpush1.msra.mxu0 0.0
    %727 = vmatprep.subr.mxu0 0.0
    %728 = vmatpush1.msra.mxu0 0.0
    %729 = vmatprep.subr.mxu0 0.0
    %730 = vmatpush1.msra.mxu0 0.0
    %731 = vmatprep.subr.mxu0 0.0
    %732 = vmatpush1.msra.mxu0 0.0
    %733 = vmatprep.subr.mxu0 0.0
    %734 = vmatpush1.msra.mxu0 0.0
    %735 = vmatprep.subr.mxu0 0.0
    %736 = vmatpush1.msra.mxu0 0.0
    %737 = vmatprep.subr.mxu0 0.0
    %738 = vmatpush1.msra.mxu0 0.0
    %739 = vmatprep.subr.mxu0 0.0
    %740 = vmatpush1.msra.mxu0 0.0
    %741 = vmatprep.subr.mxu0 0.0
    %742 = vmatpush1.msra.mxu0 0.0
    %743 = vmatprep.subr.mxu0 0.0
    %744 = vmatpush1.msra.mxu0 0.0
    %745 = vmatprep.subr.mxu0 0.0
    %746 = vmatpush1.msra.mxu0 0.0
    %747 = vmatprep.subr.mxu0 0.0
    %748 = vmatpush1.msra.mxu0 0.0
    %749 = vmatprep.subr.mxu0 0.0
    %750 = vmatpush1.msra.mxu0 0.0
    %751 = vmatprep.subr.mxu0 0.0
    %752 = vmatpush1.msra.mxu0 0.0
    %753 = vmatprep.mubr.f32.mxu0 0.0
    %754 = vmatmul.mubr.f32.gmra.mrb[0].mxu0 %v687
    %v755 = vpop.f32.mrb[0].mxu0
    %v756 = vadd.f32 %v258, %v755
    %v757 = vpop.f32.mrb[0].mxu0
    %758 = vdwg.mxu0
    %v759 = vxor.u32 %v756, 2147483648
    %v760 = vmul.f32 %v759, 1.442695
    %v761 = vpow.pop %v760
    %v762 = vadd.f32 %v761, 1.0
    %v763 = vrcp.pop %v762
    %v764 = vmul.f32 1.0, %v763
    %v765 = vtanh.pop %v756
    %v766 = vmul.f32 %v764, %v562
    %768 = vrot.lane.b32.xlu0 %v765, 120
    %v769 = vpop.permute.xlu0 %768
    %v771 = vmul.f32 %v764, %v769
    %773 = vrot.lane.b32.xlu0 %v771, 4
    %v774 = vpop.permute.xlu0 %773
    %v776 = vadd.f32 %v766, %v774
    %v777 = vtanh.pop %v776
    %779 = vrot.lane.b32.xlu0 %v777, 8
    %v780 = vpop.permute.xlu0 %779
    %v782 = vmul.f32 %v764, %v780
    %v783 = vrot.slane %v674, 4
    %784 = vrot.lane.b32.xlu0 %v783, 116
    %v785 = vpop.permute.xlu0 %784
    %v786 = vsel %vm147, %v785, 0
    %788 = vmatprep.subr.mxu0 0.0
    %789 = vmatpush1.msra.mxu0 %v152
    %790 = vmatprep.subr.mxu0 0.0
    %791 = vmatpush1.msra.mxu0 0.0
    %792 = vmatprep.subr.mxu0 0.0
    %793 = vmatpush1.msra.mxu0 0.0
    %794 = vmatprep.subr.mxu0 0.0
    %795 = vmatpush1.msra.mxu0 0.0
    %796 = vmatprep.subr.mxu0 0.0
    %797 = vmatpush1.msra.mxu0 0.0
    %798 = vmatprep.subr.mxu0 0.0
    %799 = vmatpush1.msra.mxu0 0.0
    %800 = vmatprep.subr.mxu0 0.0
    %801 = vmatpush1.msra.mxu0 0.0
    %802 = vmatprep.subr.mxu0 0.0
    %803 = vmatpush1.msra.mxu0 0.0
    %804 = vmatprep.subr.mxu0 0.0
    %805 = vmatpush1.msra.mxu0 0.0
    %806 = vmatprep.subr.mxu0 0.0
    %807 = vmatpush1.msra.mxu0 0.0
    %808 = vmatprep.subr.mxu0 0.0
    %809 = vmatpush1.msra.mxu0 0.0
    %810 = vmatprep.subr.mxu0 0.0
    %811 = vmatpush1.msra.mxu0 0.0
    %812 = vmatprep.subr.mxu0 0.0
    %813 = vmatpush1.msra.mxu0 0.0
    %814 = vmatprep.subr.mxu0 0.0
    %815 = vmatpush1.msra.mxu0 0.0
    %816 = vmatprep.subr.mxu0 0.0
    %817 = vmatpush1.msra.mxu0 0.0
    %818 = vmatprep.subr.mxu0 0.0
    %819 = vmatpush1.msra.mxu0 0.0
    %820 = vmatprep.subr.mxu0 0.0
    %821 = vmatpush1.msra.mxu0 0.0
    %822 = vmatprep.subr.mxu0 0.0
    %823 = vmatpush1.msra.mxu0 0.0
    %824 = vmatprep.subr.mxu0 0.0
    %825 = vmatpush1.msra.mxu0 0.0
    %826 = vmatprep.subr.mxu0 0.0
    %827 = vmatpush1.msra.mxu0 0.0
    %828 = vmatprep.subr.mxu0 0.0
    %829 = vmatpush1.msra.mxu0 0.0
    %830 = vmatprep.subr.mxu0 0.0
    %831 = vmatpush1.msra.mxu0 0.0
    %832 = vmatprep.subr.mxu0 0.0
    %833 = vmatpush1.msra.mxu0 0.0
    %834 = vmatprep.subr.mxu0 0.0
    %835 = vmatpush1.msra.mxu0 0.0
    %836 = vmatprep.subr.mxu0 0.0
    %837 = vmatpush1.msra.mxu0 0.0
    %838 = vmatprep.subr.mxu0 0.0
    %839 = vmatpush1.msra.mxu0 0.0
    %840 = vmatprep.subr.mxu0 0.0
    %841 = vmatpush1.msra.mxu0 0.0
    %842 = vmatprep.subr.mxu0 0.0
    %843 = vmatpush1.msra.mxu0 0.0
    %844 = vmatprep.subr.mxu0 0.0
    %845 = vmatpush1.msra.mxu0 0.0
    %846 = vmatprep.subr.mxu0 0.0
    %847 = vmatpush1.msra.mxu0 0.0
    %848 = vmatprep.subr.mxu0 0.0
    %849 = vmatpush1.msra.mxu0 0.0
    %850 = vmatprep.subr.mxu0 0.0
    %851 = vmatpush1.msra.mxu0 0.0
    %852 = vmatprep.mubr.f32.mxu0 0.0
    %853 = vmatmul.mubr.f32.gmra.mrb[0].mxu0 %v786
    %v854 = vpop.f32.mrb[0].mxu0
    %v855 = vadd.f32 0.0, %v854
    %v856 = vpop.f32.mrb[0].mxu0
    %857 = vdwg.mxu0
    %v859 = vrot.slane %v855, 2
    %v861 = vadd.f32 %v139, %v859
    %v862 = vxor.u32 %v861, 2147483648
    %v863 = vmul.f32 %v862, 1.442695
    %v864 = vpow.pop %v863
    %v865 = vadd.f32 %v864, 1.0
    %v866 = vrcp.pop %v865
    %v867 = vmul.f32 1.0, %v866
    %v868 = vtanh.pop %v861
    %v870 = vrot.slane %v668, 6
    %v872 = vmul.f32 %v867, %v870
    %874 = vrot.lane.b32.xlu0 %v868, 120
    %v875 = vpop.permute.xlu0 %874
    %v877 = vmul.f32 %v867, %v875
    %879 = vrot.lane.b32.xlu0 %v877, 4
    %v880 = vpop.permute.xlu0 %879
    %v882 = vadd.f32 %v872, %v880
    %v883 = vtanh.pop %v882
    %885 = vrot.lane.b32.xlu0 %v883, 8
    %v886 = vpop.permute.xlu0 %885
    %v888 = vmul.f32 %v867, %v886
    %890 = vrot.lane.b32.xlu0 %v888, 116
    %v891 = vpop.permute.xlu0 %890
    %v894 = vrot.slane %v782, 2
    %895 = vrot.lane.b32.xlu0 %v894, 120
    %v896 = vpop.permute.xlu0 %895
    %v898 = vsel %vm147, %v891, %v896
    %v900 = vrot.slane %v898, 6
    %v901 = vsel %vm260, %v900, 0
    %903 = vmatprep.subr.mxu0 0.0
    %904 = vmatpush1.msra.mxu0 %v46
    %905 = vmatprep.subr.mxu0 0.0
    %906 = vmatpush1.msra.mxu0 0.0
    %907 = vmatprep.subr.mxu0 0.0
    %908 = vmatpush1.msra.mxu0 0.0
    %909 = vmatprep.subr.mxu0 0.0
    %910 = vmatpush1.msra.mxu0 0.0
    %911 = vmatprep.subr.mxu0 0.0
    %912 = vmatpush1.msra.mxu0 0.0
    %913 = vmatprep.subr.mxu0 0.0
    %914 = vmatpush1.msra.mxu0 0.0
    %915 = vmatprep.subr.mxu0 0.0
    %916 = vmatpush1.msra.mxu0 0.0
    %917 = vmatprep.subr.mxu0 0.0
    %918 = vmatpush1.msra.mxu0 0.0
    %919 = vmatprep.subr.mxu0 0.0
    %920 = vmatpush1.msra.mxu0 0.0
    %921 = vmatprep.subr.mxu0 0.0
    %922 = vmatpush1.msra.mxu0 0.0
    %923 = vmatprep.subr.mxu0 0.0
    %924 = vmatpush1.msra.mxu0 0.0
    %925 = vmatprep.subr.mxu0 0.0
    %926 = vmatpush1.msra.mxu0 0.0
    %927 = vmatprep.subr.mxu0 0.0
    %928 = vmatpush1.msra.mxu0 0.0
    %929 = vmatprep.subr.mxu0 0.0
    %930 = vmatpush1.msra.mxu0 0.0
    %931 = vmatprep.subr.mxu0 0.0
    %932 = vmatpush1.msra.mxu0 0.0
    %933 = vmatprep.subr.mxu0 0.0
    %934 = vmatpush1.msra.mxu0 0.0
    %935 = vmatprep.subr.mxu0 0.0
    %936 = vmatpush1.msra.mxu0 0.0
    %937 = vmatprep.subr.mxu0 0.0
    %938 = vmatpush1.msra.mxu0 0.0
    %939 = vmatprep.subr.mxu0 0.0
    %940 = vmatpush1.msra.mxu0 0.0
    %941 = vmatprep.subr.mxu0 0.0
    %942 = vmatpush1.msra.mxu0 0.0
    %943 = vmatprep.subr.mxu0 0.0
    %944 = vmatpush1.msra.mxu0 0.0
    %945 = vmatprep.subr.mxu0 0.0
    %946 = vmatpush1.msra.mxu0 0.0
    %947 = vmatprep.subr.mxu0 0.0
    %948 = vmatpush1.msra.mxu0 0.0
    %949 = vmatprep.subr.mxu0 0.0
    %950 = vmatpush1.msra.mxu0 0.0
    %951 = vmatprep.subr.mxu0 0.0
    %952 = vmatpush1.msra.mxu0 0.0
    %953 = vmatprep.subr.mxu0 0.0
    %954 = vmatpush1.msra.mxu0 0.0
    %955 = vmatprep.subr.mxu0 0.0
    %956 = vmatpush1.msra.mxu0 0.0
    %957 = vmatprep.subr.mxu0 0.0
    %958 = vmatpush1.msra.mxu0 0.0
    %959 = vmatprep.subr.mxu0 0.0
    %960 = vmatpush1.msra.mxu0 0.0
    %961 = vmatprep.subr.mxu0 0.0
    %962 = vmatpush1.msra.mxu0 0.0
    %963 = vmatprep.subr.mxu0 0.0
    %964 = vmatpush1.msra.mxu0 0.0
    %965 = vmatprep.subr.mxu0 0.0
    %966 = vmatpush1.msra.mxu0 0.0
    %967 = vmatprep.mubr.f32.mxu0 0.0
    %968 = vmatmul.mubr.f32.gmra.mrb[0].mxu0 %v901
    %v969 = vpop.f32.mrb[0].mxu0
    %v970 = vadd.f32 %v258, %v969
    %v971 = vpop.f32.mrb[0].mxu0
    %972 = vdwg.mxu0
    %v973 = vxor.u32 %v970, 2147483648
    %v974 = vmul.f32 %v973, 1.442695
    %v975 = vpow.pop %v974
    %v976 = vadd.f32 %v975, 1.0
    %v977 = vrcp.pop %v976
    %v978 = vmul.f32 1.0, %v977
    %v979 = vtanh.pop %v970
    %v980 = vmul.f32 %v978, %v776
    %982 = vrot.lane.b32.xlu0 %v979, 120
    %v983 = vpop.permute.xlu0 %982
    %v985 = vmul.f32 %v978, %v983
    %987 = vrot.lane.b32.xlu0 %v985, 4
    %v988 = vpop.permute.xlu0 %987
    %v990 = vadd.f32 %v980, %v988
    %v991 = vtanh.pop %v990
    %993 = vrot.lane.b32.xlu0 %v991, 8
    %v994 = vpop.permute.xlu0 %993
    %v996 = vmul.f32 %v978, %v994
    %v997 = vrot.slane %v888, 6
    %998 = vrot.lane.b32.xlu0 %v997, 116
    %v999 = vpop.permute.xlu0 %998
    %v1000 = vsel %vm147, %v999, 0
    %1002 = vmatprep.subr.mxu0 0.0
    %1003 = vmatpush1.msra.mxu0 %v152
    %1004 = vmatprep.subr.mxu0 0.0
    %1005 = vmatpush1.msra.mxu0 0.0
    %1006 = vmatprep.subr.mxu0 0.0
    %1007 = vmatpush1.msra.mxu0 0.0
    %1008 = vmatprep.subr.mxu0 0.0
    %1009 = vmatpush1.msra.mxu0 0.0
    %1010 = vmatprep.subr.mxu0 0.0
    %1011 = vmatpush1.msra.mxu0 0.0
    %1012 = vmatprep.subr.mxu0 0.0
    %1013 = vmatpush1.msra.mxu0 0.0
    %1014 = vmatprep.subr.mxu0 0.0
    %1015 = vmatpush1.msra.mxu0 0.0
    %1016 = vmatprep.subr.mxu0 0.0
    %1017 = vmatpush1.msra.mxu0 0.0
    %1018 = vmatprep.subr.mxu0 0.0
    %1019 = vmatpush1.msra.mxu0 0.0
    %1020 = vmatprep.subr.mxu0 0.0
    %1021 = vmatpush1.msra.mxu0 0.0
    %1022 = vmatprep.subr.mxu0 0.0
    %1023 = vmatpush1.msra.mxu0 0.0
    %1024 = vmatprep.subr.mxu0 0.0
    %1025 = vmatpush1.msra.mxu0 0.0
    %1026 = vmatprep.subr.mxu0 0.0
    %1027 = vmatpush1.msra.mxu0 0.0
    %1028 = vmatprep.subr.mxu0 0.0
    %1029 = vmatpush1.msra.mxu0 0.0
    %1030 = vmatprep.subr.mxu0 0.0
    %1031 = vmatpush1.msra.mxu0 0.0
    %1032 = vmatprep.subr.mxu0 0.0
    %1033 = vmatpush1.msra.mxu0 0.0
    %1034 = vmatprep.subr.mxu0 0.0
    %1035 = vmatpush1.msra.mxu0 0.0
    %1036 = vmatprep.subr.mxu0 0.0
    %1037 = vmatpush1.msra.mxu0 0.0
    %1038 = vmatprep.subr.mxu0 0.0
    %1039 = vmatpush1.msra.mxu0 0.0
    %1040 = vmatprep.subr.mxu0 0.0
    %1041 = vmatpush1.msra.mxu0 0.0
    %1042 = vmatprep.subr.mxu0 0.0
    %1043 = vmatpush1.msra.mxu0 0.0
    %1044 = vmatprep.subr.mxu0 0.0
    %1045 = vmatpush1.msra.mxu0 0.0
    %1046 = vmatprep.subr.mxu0 0.0
    %1047 = vmatpush1.msra.mxu0 0.0
    %1048 = vmatprep.subr.mxu0 0.0
    %1049 = vmatpush1.msra.mxu0 0.0
    %1050 = vmatprep.subr.mxu0 0.0
    %1051 = vmatpush1.msra.mxu0 0.0
    %1052 = vmatprep.subr.mxu0 0.0
    %1053 = vmatpush1.msra.mxu0 0.0
    %1054 = vmatprep.subr.mxu0 0.0
    %1055 = vmatpush1.msra.mxu0 0.0
    %1056 = vmatprep.subr.mxu0 0.0
    %1057 = vmatpush1.msra.mxu0 0.0
    %1058 = vmatprep.subr.mxu0 0.0
    %1059 = vmatpush1.msra.mxu0 0.0
    %1060 = vmatprep.subr.mxu0 0.0
    %1061 = vmatpush1.msra.mxu0 0.0
    %1062 = vmatprep.subr.mxu0 0.0
    %1063 = vmatpush1.msra.mxu0 0.0
    %1064 = vmatprep.subr.mxu0 0.0
    %1065 = vmatpush1.msra.mxu0 0.0
    %1066 = vmatprep.mubr.f32.mxu0 0.0
    %1067 = vmatmul.mubr.f32.gmra.mrb[0].mxu0 %v1000
    %v1068 = vpop.f32.mrb[0].mxu0
    %v1069 = vadd.f32 0.0, %v1068
    %v1070 = vpop.f32.mrb[0].mxu0
    %1071 = vdwg.mxu0
    %v1072 = vadd.f32 %v144, %v1069
    %v1073 = vxor.u32 %v1072, 2147483648
    %v1074 = vmul.f32 %v1073, 1.442695
    %v1075 = vpow.pop %v1074
    %v1076 = vadd.f32 %v1075, 1.0
    %v1077 = vrcp.pop %v1076
    %v1078 = vmul.f32 1.0, %v1077
    %v1079 = vtanh.pop %v1072
    %v1081 = vrot.slane %v882, 6
    %v1083 = vmul.f32 %v1078, %v1081
    %1085 = vrot.lane.b32.xlu0 %v1079, 120
    %v1086 = vpop.permute.xlu0 %1085
    %v1088 = vmul.f32 %v1078, %v1086
    %1090 = vrot.lane.b32.xlu0 %v1088, 4
    %v1091 = vpop.permute.xlu0 %1090
    %v1093 = vadd.f32 %v1083, %v1091
    %v1094 = vtanh.pop %v1093
    %1096 = vrot.lane.b32.xlu0 %v1094, 8
    %v1097 = vpop.permute.xlu0 %1096
    %v1099 = vmul.f32 %v1078, %v1097
    %1101 = vrot.lane.b32.xlu0 %v1099, 116
    %v1102 = vpop.permute.xlu0 %1101
    %1105 = vrot.lane.b32.xlu0 %v996, 120
    %v1106 = vpop.permute.xlu0 %1105
    %v1108 = vsel %vm147, %v1102, %v1106
    %v1110 = vsel %vm260, %v1108, 0
    %1112 = vmatprep.subr.mxu0 0.0
    %1113 = vmatpush1.msra.mxu0 %v46
    %1114 = vmatprep.subr.mxu0 0.0
    %1115 = vmatpush1.msra.mxu0 0.0
    %1116 = vmatprep.subr.mxu0 0.0
    %1117 = vmatpush1.msra.mxu0 0.0
    %1118 = vmatprep.subr.mxu0 0.0
    %1119 = vmatpush1.msra.mxu0 0.0
    %1120 = vmatprep.subr.mxu0 0.0
    %1121 = vmatpush1.msra.mxu0 0.0
    %1122 = vmatprep.subr.mxu0 0.0
    %1123 = vmatpush1.msra.mxu0 0.0
    %1124 = vmatprep.subr.mxu0 0.0
    %1125 = vmatpush1.msra.mxu0 0.0
    %1126 = vmatprep.subr.mxu0 0.0
    %1127 = vmatpush1.msra.mxu0 0.0
    %1128 = vmatprep.subr.mxu0 0.0
    %1129 = vmatpush1.msra.mxu0 0.0
    %1130 = vmatprep.subr.mxu0 0.0
    %1131 = vmatpush1.msra.mxu0 0.0
    %1132 = vmatprep.subr.mxu0 0.0
    %1133 = vmatpush1.msra.mxu0 0.0
    %1134 = vmatprep.subr.mxu0 0.0
    %1135 = vmatpush1.msra.mxu0 0.0
    %1136 = vmatprep.subr.mxu0 0.0
    %1137 = vmatpush1.msra.mxu0 0.0
    %1138 = vmatprep.subr.mxu0 0.0
    %1139 = vmatpush1.msra.mxu0 0.0
    %1140 = vmatprep.subr.mxu0 0.0
    %1141 = vmatpush1.msra.mxu0 0.0
    %1142 = vmatprep.subr.mxu0 0.0
    %1143 = vmatpush1.msra.mxu0 0.0
    %1144 = vmatprep.subr.mxu0 0.0
    %1145 = vmatpush1.msra.mxu0 0.0
    %1146 = vmatprep.subr.mxu0 0.0
    %1147 = vmatpush1.msra.mxu0 0.0
    %1148 = vmatprep.subr.mxu0 0.0
    %1149 = vmatpush1.msra.mxu0 0.0
    %1150 = vmatprep.subr.mxu0 0.0
    %1151 = vmatpush1.msra.mxu0 0.0
    %1152 = vmatprep.subr.mxu0 0.0
    %1153 = vmatpush1.msra.mxu0 0.0
    %1154 = vmatprep.subr.mxu0 0.0
    %1155 = vmatpush1.msra.mxu0 0.0
    %1156 = vmatprep.subr.mxu0 0.0
    %1157 = vmatpush1.msra.mxu0 0.0
    %1158 = vmatprep.subr.mxu0 0.0
    %1159 = vmatpush1.msra.mxu0 0.0
    %1160 = vmatprep.subr.mxu0 0.0
    %1161 = vmatpush1.msra.mxu0 0.0
    %1162 = vmatprep.subr.mxu0 0.0
    %1163 = vmatpush1.msra.mxu0 0.0
    %1164 = vmatprep.subr.mxu0 0.0
    %1165 = vmatpush1.msra.mxu0 0.0
    %1166 = vmatprep.subr.mxu0 0.0
    %1167 = vmatpush1.msra.mxu0 0.0
    %1168 = vmatprep.subr.mxu0 0.0
    %1169 = vmatpush1.msra.mxu0 0.0
    %1170 = vmatprep.subr.mxu0 0.0
    %1171 = vmatpush1.msra.mxu0 0.0
    %1172 = vmatprep.subr.mxu0 0.0
    %1173 = vmatpush1.msra.mxu0 0.0
    %1174 = vmatprep.subr.mxu0 0.0
    %1175 = vmatpush1.msra.mxu0 0.0
    %1176 = vmatprep.mubr.f32.mxu0 0.0
    %1177 = vmatmul.mubr.f32.gmra.mrb[0].mxu0 %v1110
    %v1178 = vpop.f32.mrb[0].mxu0
    %v1179 = vadd.f32 %v258, %v1178
    %v1180 = vpop.f32.mrb[0].mxu0
    %1181 = vdwg.mxu0
    %v1182 = vxor.u32 %v1179, 2147483648
    %v1183 = vmul.f32 %v1182, 1.442695
    %v1184 = vpow.pop %v1183
    %v1185 = vadd.f32 %v1184, 1.0
    %v1186 = vrcp.pop %v1185
    %v1187 = vmul.f32 1.0, %v1186
    %v1188 = vtanh.pop %v1179
    %v1189 = vmul.f32 %v1187, %v990
    %1191 = vrot.lane.b32.xlu0 %v1188, 120
    %v1192 = vpop.permute.xlu0 %1191
    %v1194 = vmul.f32 %v1187, %v1192
    %1196 = vrot.lane.b32.xlu0 %v1194, 4
    %v1197 = vpop.permute.xlu0 %1196
    %v1199 = vadd.f32 %v1189, %v1197
    %v1200 = vtanh.pop %v1199
    %1202 = vrot.lane.b32.xlu0 %v1200, 8
    %v1203 = vpop.permute.xlu0 %1202
    %v1205 = vmul.f32 %v1187, %v1203
    %v1206 = vsel %vm147, %v1102, 0
    %1208 = vmatprep.subr.mxu0 0.0
    %1209 = vmatpush1.msra.mxu0 %v152
    %1210 = vmatprep.subr.mxu0 0.0
    %1211 = vmatpush1.msra.mxu0 0.0
    %1212 = vmatprep.subr.mxu0 0.0
    %1213 = vmatpush1.msra.mxu0 0.0
    %1214 = vmatprep.subr.mxu0 0.0
    %1215 = vmatpush1.msra.mxu0 0.0
    %1216 = vmatprep.subr.mxu0 0.0
    %1217 = vmatpush1.msra.mxu0 0.0
    %1218 = vmatprep.subr.mxu0 0.0
    %1219 = vmatpush1.msra.mxu0 0.0
    %1220 = vmatprep.subr.mxu0 0.0
    %1221 = vmatpush1.msra.mxu0 0.0
    %1222 = vmatprep.subr.mxu0 0.0
    %1223 = vmatpush1.msra.mxu0 0.0
    %1224 = vmatprep.subr.mxu0 0.0
    %1225 = vmatpush1.msra.mxu0 0.0
    %1226 = vmatprep.subr.mxu0 0.0
    %1227 = vmatpush1.msra.mxu0 0.0
    %1228 = vmatprep.subr.mxu0 0.0
    %1229 = vmatpush1.msra.mxu0 0.0
    %1230 = vmatprep.subr.mxu0 0.0
    %1231 = vmatpush1.msra.mxu0 0.0
    %1232 = vmatprep.subr.mxu0 0.0
    %1233 = vmatpush1.msra.mxu0 0.0
    %1234 = vmatprep.subr.mxu0 0.0
    %1235 = vmatpush1.msra.mxu0 0.0
    %1236 = vmatprep.subr.mxu0 0.0
    %1237 = vmatpush1.msra.mxu0 0.0
    %1238 = vmatprep.subr.mxu0 0.0
    %1239 = vmatpush1.msra.mxu0 0.0
    %1240 = vmatprep.subr.mxu0 0.0
    %1241 = vmatpush1.msra.mxu0 0.0
    %1242 = vmatprep.subr.mxu0 0.0
    %1243 = vmatpush1.msra.mxu0 0.0
    %1244 = vmatprep.subr.mxu0 0.0
    %1245 = vmatpush1.msra.mxu0 0.0
    %1246 = vmatprep.subr.mxu0 0.0
    %1247 = vmatpush1.msra.mxu0 0.0
    %1248 = vmatprep.subr.mxu0 0.0
    %1249 = vmatpush1.msra.mxu0 0.0
    %1250 = vmatprep.subr.mxu0 0.0
    %1251 = vmatpush1.msra.mxu0 0.0
    %1252 = vmatprep.subr.mxu0 0.0
    %1253 = vmatpush1.msra.mxu0 0.0
    %1254 = vmatprep.subr.mxu0 0.0
    %1255 = vmatpush1.msra.mxu0 0.0
    %1256 = vmatprep.subr.mxu0 0.0
    %1257 = vmatpush1.msra.mxu0 0.0
    %1258 = vmatprep.subr.mxu0 0.0
    %1259 = vmatpush1.msra.mxu0 0.0
    %1260 = vmatprep.subr.mxu0 0.0
    %1261 = vmatpush1.msra.mxu0 0.0
    %1262 = vmatprep.subr.mxu0 0.0
    %1263 = vmatpush1.msra.mxu0 0.0
    %1264 = vmatprep.subr.mxu0 0.0
    %1265 = vmatpush1.msra.mxu0 0.0
    %1266 = vmatprep.subr.mxu0 0.0
    %1267 = vmatpush1.msra.mxu0 0.0
    %1268 = vmatprep.subr.mxu0 0.0
    %1269 = vmatpush1.msra.mxu0 0.0
    %1270 = vmatprep.subr.mxu0 0.0
    %1271 = vmatpush1.msra.mxu0 0.0
    %1272 = vmatprep.mubr.f32.mxu0 0.0
    %1273 = vmatmul.mubr.f32.gmra.mrb[0].mxu0 %v1206
    %v1274 = vpop.f32.mrb[0].mxu0
    %v1275 = vadd.f32 0.0, %v1274
    %v1276 = vpop.f32.mrb[0].mxu0
    %1277 = vdwg.mxu0
    %v1279 = vrot.slane %v1275, 6
    %v1281 = vadd.f32 %v144, %v1279
    %v1282 = vxor.u32 %v1281, 2147483648
    %v1283 = vmul.f32 %v1282, 1.442695
    %v1284 = vpow.pop %v1283
    %v1285 = vadd.f32 %v1284, 1.0
    %v1286 = vrcp.pop %v1285
    %v1287 = vmul.f32 1.0, %v1286
    %v1288 = vtanh.pop %v1281
    %v1290 = vrot.slane %v1093, 6
    %v1292 = vmul.f32 %v1287, %v1290
    %1294 = vrot.lane.b32.xlu0 %v1288, 120
    %v1295 = vpop.permute.xlu0 %1294
    %v1297 = vmul.f32 %v1287, %v1295
    %1299 = vrot.lane.b32.xlu0 %v1297, 4
    %v1300 = vpop.permute.xlu0 %1299
    %v1302 = vadd.f32 %v1292, %v1300
    %v1303 = vtanh.pop %v1302
    %1305 = vrot.lane.b32.xlu0 %v1303, 8
    %v1306 = vpop.permute.xlu0 %1305
    %v1308 = vmul.f32 %v1287, %v1306
    %1310 = vrot.lane.b32.xlu0 %v1308, 116
    %v1311 = vpop.permute.xlu0 %1310
    %v1314 = vrot.slane %v1205, 6
    %1315 = vrot.lane.b32.xlu0 %v1314, 120
    %v1316 = vpop.permute.xlu0 %1315
    %v1318 = vsel %vm147, %v1311, %v1316
    %v1320 = vrot.slane %v1318, 2
    %v1321 = vsel %vm260, %v1320, 0
    %1323 = vmatprep.subr.mxu0 0.0
    %1324 = vmatpush1.msra.mxu0 %v46
    %1325 = vmatprep.subr.mxu0 0.0
    %1326 = vmatpush1.msra.mxu0 0.0
    %1327 = vmatprep.subr.mxu0 0.0
    %1328 = vmatpush1.msra.mxu0 0.0
    %1329 = vmatprep.subr.mxu0 0.0
    %1330 = vmatpush1.msra.mxu0 0.0
    %1331 = vmatprep.subr.mxu0 0.0
    %1332 = vmatpush1.msra.mxu0 0.0
    %1333 = vmatprep.subr.mxu0 0.0
    %1334 = vmatpush1.msra.mxu0 0.0
    %1335 = vmatprep.subr.mxu0 0.0
    %1336 = vmatpush1.msra.mxu0 0.0
    %1337 = vmatprep.subr.mxu0 0.0
    %1338 = vmatpush1.msra.mxu0 0.0
    %1339 = vmatprep.subr.mxu0 0.0
    %1340 = vmatpush1.msra.mxu0 0.0
    %1341 = vmatprep.subr.mxu0 0.0
    %1342 = vmatpush1.msra.mxu0 0.0
    %1343 = vmatprep.subr.mxu0 0.0
    %1344 = vmatpush1.msra.mxu0 0.0
    %1345 = vmatprep.subr.mxu0 0.0
    %1346 = vmatpush1.msra.mxu0 0.0
    %1347 = vmatprep.subr.mxu0 0.0
    %1348 = vmatpush1.msra.mxu0 0.0
    %1349 = vmatprep.subr.mxu0 0.0
    %1350 = vmatpush1.msra.mxu0 0.0
    %1351 = vmatprep.subr.mxu0 0.0
    %1352 = vmatpush1.msra.mxu0 0.0
    %1353 = vmatprep.subr.mxu0 0.0
    %1354 = vmatpush1.msra.mxu0 0.0
    %1355 = vmatprep.subr.mxu0 0.0
    %1356 = vmatpush1.msra.mxu0 0.0
    %1357 = vmatprep.subr.mxu0 0.0
    %1358 = vmatpush1.msra.mxu0 0.0
    %1359 = vmatprep.subr.mxu0 0.0
    %1360 = vmatpush1.msra.mxu0 0.0
    %1361 = vmatprep.subr.mxu0 0.0
    %1362 = vmatpush1.msra.mxu0 0.0
    %1363 = vmatprep.subr.mxu0 0.0
    %1364 = vmatpush1.msra.mxu0 0.0
    %1365 = vmatprep.subr.mxu0 0.0
    %1366 = vmatpush1.msra.mxu0 0.0
    %1367 = vmatprep.subr.mxu0 0.0
    %1368 = vmatpush1.msra.mxu0 0.0
    %1369 = vmatprep.subr.mxu0 0.0
    %1370 = vmatpush1.msra.mxu0 0.0
    %1371 = vmatprep.subr.mxu0 0.0
    %1372 = vmatpush1.msra.mxu0 0.0
    %1373 = vmatprep.subr.mxu0 0.0
    %1374 = vmatpush1.msra.mxu0 0.0
    %1375 = vmatprep.subr.mxu0 0.0
    %1376 = vmatpush1.msra.mxu0 0.0
    %1377 = vmatprep.subr.mxu0 0.0
    %1378 = vmatpush1.msra.mxu0 0.0
    %1379 = vmatprep.subr.mxu0 0.0
    %1380 = vmatpush1.msra.mxu0 0.0
    %1381 = vmatprep.subr.mxu0 0.0
    %1382 = vmatpush1.msra.mxu0 0.0
    %1383 = vmatprep.subr.mxu0 0.0
    %1384 = vmatpush1.msra.mxu0 0.0
    %1385 = vmatprep.subr.mxu0 0.0
    %1386 = vmatpush1.msra.mxu0 0.0
    %1387 = vmatprep.mubr.f32.mxu0 0.0
    %1388 = vmatmul.mubr.f32.gmra.mrb[0].mxu0 %v1321
    %v1389 = vpop.f32.mrb[0].mxu0
    %v1390 = vadd.f32 %v258, %v1389
    %v1391 = vpop.f32.mrb[0].mxu0
    %1392 = vdwg.mxu0
    %v1393 = vxor.u32 %v1390, 2147483648
    %v1394 = vmul.f32 %v1393, 1.442695
    %v1395 = vpow.pop %v1394
    %v1396 = vadd.f32 %v1395, 1.0
    %v1397 = vrcp.pop %v1396
    %v1398 = vmul.f32 1.0, %v1397
    %v1399 = vtanh.pop %v1390
    %v1400 = vmul.f32 %v1398, %v1199
    %1402 = vrot.lane.b32.xlu0 %v1399, 120
    %v1403 = vpop.permute.xlu0 %1402
    %v1405 = vmul.f32 %v1398, %v1403
    %1407 = vrot.lane.b32.xlu0 %v1405, 4
    %v1408 = vpop.permute.xlu0 %1407
    %v1410 = vadd.f32 %v1400, %v1408
    %v1411 = vtanh.pop %v1410
    %1413 = vrot.lane.b32.xlu0 %v1411, 8
    %v1414 = vpop.permute.xlu0 %1413
    %v1416 = vmul.f32 %v1398, %v1414
    %v1417 = vrot.slane %v1308, 2
    %1418 = vrot.lane.b32.xlu0 %v1417, 116
    %v1419 = vpop.permute.xlu0 %1418
    %v1420 = vsel %vm147, %v1419, 0
    %1422 = vmatprep.subr.mxu0 0.0
    %1423 = vmatpush1.msra.mxu0 %v152
    %1424 = vmatprep.subr.mxu0 0.0
    %1425 = vmatpush1.msra.mxu0 0.0
    %1426 = vmatprep.subr.mxu0 0.0
    %1427 = vmatpush1.msra.mxu0 0.0
    %1428 = vmatprep.subr.mxu0 0.0
    %1429 = vmatpush1.msra.mxu0 0.0
    %1430 = vmatprep.subr.mxu0 0.0
    %1431 = vmatpush1.msra.mxu0 0.0
    %1432 = vmatprep.subr.mxu0 0.0
    %1433 = vmatpush1.msra.mxu0 0.0
    %1434 = vmatprep.subr.mxu0 0.0
    %1435 = vmatpush1.msra.mxu0 0.0
    %1436 = vmatprep.subr.mxu0 0.0
    %1437 = vmatpush1.msra.mxu0 0.0
    %1438 = vmatprep.subr.mxu0 0.0
    %1439 = vmatpush1.msra.mxu0 0.0
    %1440 = vmatprep.subr.mxu0 0.0
    %1441 = vmatpush1.msra.mxu0 0.0
    %1442 = vmatprep.subr.mxu0 0.0
    %1443 = vmatpush1.msra.mxu0 0.0
    %1444 = vmatprep.subr.mxu0 0.0
    %1445 = vmatpush1.msra.mxu0 0.0
    %1446 = vmatprep.subr.mxu0 0.0
    %1447 = vmatpush1.msra.mxu0 0.0
    %1448 = vmatprep.subr.mxu0 0.0
    %1449 = vmatpush1.msra.mxu0 0.0
    %1450 = vmatprep.subr.mxu0 0.0
    %1451 = vmatpush1.msra.mxu0 0.0
    %1452 = vmatprep.subr.mxu0 0.0
    %1453 = vmatpush1.msra.mxu0 0.0
    %1454 = vmatprep.subr.mxu0 0.0
    %1455 = vmatpush1.msra.mxu0 0.0
    %1456 = vmatprep.subr.mxu0 0.0
    %1457 = vmatpush1.msra.mxu0 0.0
    %1458 = vmatprep.subr.mxu0 0.0
    %1459 = vmatpush1.msra.mxu0 0.0
    %1460 = vmatprep.subr.mxu0 0.0
    %1461 = vmatpush1.msra.mxu0 0.0
    %1462 = vmatprep.subr.mxu0 0.0
    %1463 = vmatpush1.msra.mxu0 0.0
    %1464 = vmatprep.subr.mxu0 0.0
    %1465 = vmatpush1.msra.mxu0 0.0
    %1466 = vmatprep.subr.mxu0 0.0
    %1467 = vmatpush1.msra.mxu0 0.0
    %1468 = vmatprep.subr.mxu0 0.0
    %1469 = vmatpush1.msra.mxu0 0.0
    %1470 = vmatprep.subr.mxu0 0.0
    %1471 = vmatpush1.msra.mxu0 0.0
    %1472 = vmatprep.subr.mxu0 0.0
    %1473 = vmatpush1.msra.mxu0 0.0
    %1474 = vmatprep.subr.mxu0 0.0
    %1475 = vmatpush1.msra.mxu0 0.0
    %1476 = vmatprep.subr.mxu0 0.0
    %1477 = vmatpush1.msra.mxu0 0.0
    %1478 = vmatprep.subr.mxu0 0.0
    %1479 = vmatpush1.msra.mxu0 0.0
    %1480 = vmatprep.subr.mxu0 0.0
    %1481 = vmatpush1.msra.mxu0 0.0
    %1482 = vmatprep.subr.mxu0 0.0
    %1483 = vmatpush1.msra.mxu0 0.0
    %1484 = vmatprep.subr.mxu0 0.0
    %1485 = vmatpush1.msra.mxu0 0.0
    %1486 = vmatprep.mubr.f32.mxu0 0.0
    %1487 = vmatmul.mubr.f32.gmra.mrb[0].mxu0 %v1420
    %v1488 = vpop.f32.mrb[0].mxu0
    %v1489 = vadd.f32 0.0, %v1488
    %v1490 = vpop.f32.mrb[0].mxu0
    %1491 = vdwg.mxu0
    %v1493 = vrot.slane %v1489, 4
    %v1495 = vadd.f32 %v144, %v1493
    %v1496 = vxor.u32 %v1495, 2147483648
    %v1497 = vmul.f32 %v1496, 1.442695
    %v1498 = vpow.pop %v1497
    %v1499 = vadd.f32 %v1498, 1.0
    %v1500 = vrcp.pop %v1499
    %v1501 = vmul.f32 1.0, %v1500
    %v1502 = vtanh.pop %v1495
    %v1504 = vrot.slane %v1302, 6
    %v1506 = vmul.f32 %v1501, %v1504
    %1508 = vrot.lane.b32.xlu0 %v1502, 120
    %v1509 = vpop.permute.xlu0 %1508
    %v1511 = vmul.f32 %v1501, %v1509
    %1513 = vrot.lane.b32.xlu0 %v1511, 4
    %v1514 = vpop.permute.xlu0 %1513
    %v1516 = vadd.f32 %v1506, %v1514
    %v1517 = vtanh.pop %v1516
    %1519 = vrot.lane.b32.xlu0 %v1517, 8
    %v1520 = vpop.permute.xlu0 %1519
    %v1522 = vmul.f32 %v1501, %v1520
    %1524 = vrot.lane.b32.xlu0 %v1522, 116
    %v1525 = vpop.permute.xlu0 %1524
    %v1528 = vrot.slane %v1416, 4
    %1529 = vrot.lane.b32.xlu0 %v1528, 120
    %v1530 = vpop.permute.xlu0 %1529
    %v1532 = vsel %vm147, %v1525, %v1530
    %v1534 = vrot.slane %v1532, 4
    %v1535 = vsel %vm260, %v1534, 0
    %1537 = vmatprep.subr.mxu0 0.0
    %1538 = vmatpush1.msra.mxu0 %v46
    %1539 = vmatprep.subr.mxu0 0.0
    %1540 = vmatpush1.msra.mxu0 0.0
    %1541 = vmatprep.subr.mxu0 0.0
    %1542 = vmatpush1.msra.mxu0 0.0
    %1543 = vmatprep.subr.mxu0 0.0
    %1544 = vmatpush1.msra.mxu0 0.0
    %1545 = vmatprep.subr.mxu0 0.0
    %1546 = vmatpush1.msra.mxu0 0.0
    %1547 = vmatprep.subr.mxu0 0.0
    %1548 = vmatpush1.msra.mxu0 0.0
    %1549 = vmatprep.subr.mxu0 0.0
    %1550 = vmatpush1.msra.mxu0 0.0
    %1551 = vmatprep.subr.mxu0 0.0
    %1552 = vmatpush1.msra.mxu0 0.0
    %1553 = vmatprep.subr.mxu0 0.0
    %1554 = vmatpush1.msra.mxu0 0.0
    %1555 = vmatprep.subr.mxu0 0.0
    %1556 = vmatpush1.msra.mxu0 0.0
    %1557 = vmatprep.subr.mxu0 0.0
    %1558 = vmatpush1.msra.mxu0 0.0
    %1559 = vmatprep.subr.mxu0 0.0
    %1560 = vmatpush1.msra.mxu0 0.0
    %1561 = vmatprep.subr.mxu0 0.0
    %1562 = vmatpush1.msra.mxu0 0.0
    %1563 = vmatprep.subr.mxu0 0.0
    %1564 = vmatpush1.msra.mxu0 0.0
    %1565 = vmatprep.subr.mxu0 0.0
    %1566 = vmatpush1.msra.mxu0 0.0
    %1567 = vmatprep.subr.mxu0 0.0
    %1568 = vmatpush1.msra.mxu0 0.0
    %1569 = vmatprep.subr.mxu0 0.0
    %1570 = vmatpush1.msra.mxu0 0.0
    %1571 = vmatprep.subr.mxu0 0.0
    %1572 = vmatpush1.msra.mxu0 0.0
    %1573 = vmatprep.subr.mxu0 0.0
    %1574 = vmatpush1.msra.mxu0 0.0
    %1575 = vmatprep.subr.mxu0 0.0
    %1576 = vmatpush1.msra.mxu0 0.0
    %1577 = vmatprep.subr.mxu0 0.0
    %1578 = vmatpush1.msra.mxu0 0.0
    %1579 = vmatprep.subr.mxu0 0.0
    %1580 = vmatpush1.msra.mxu0 0.0
    %1581 = vmatprep.subr.mxu0 0.0
    %1582 = vmatpush1.msra.mxu0 0.0
    %1583 = vmatprep.subr.mxu0 0.0
    %1584 = vmatpush1.msra.mxu0 0.0
    %1585 = vmatprep.subr.mxu0 0.0
    %1586 = vmatpush1.msra.mxu0 0.0
    %1587 = vmatprep.subr.mxu0 0.0
    %1588 = vmatpush1.msra.mxu0 0.0
    %1589 = vmatprep.subr.mxu0 0.0
    %1590 = vmatpush1.msra.mxu0 0.0
    %1591 = vmatprep.subr.mxu0 0.0
    %1592 = vmatpush1.msra.mxu0 0.0
    %1593 = vmatprep.subr.mxu0 0.0
    %1594 = vmatpush1.msra.mxu0 0.0
    %1595 = vmatprep.subr.mxu0 0.0
    %1596 = vmatpush1.msra.mxu0 0.0
    %1597 = vmatprep.subr.mxu0 0.0
    %1598 = vmatpush1.msra.mxu0 0.0
    %1599 = vmatprep.subr.mxu0 0.0
    %1600 = vmatpush1.msra.mxu0 0.0
    %1601 = vmatprep.mubr.f32.mxu0 0.0
    %1602 = vmatmul.mubr.f32.gmra.mrb[0].mxu0 %v1535
    %v1603 = vpop.f32.mrb[0].mxu0
    %v1604 = vadd.f32 %v258, %v1603
    %v1605 = vpop.f32.mrb[0].mxu0
    %1606 = vdwg.mxu0
    %v1607 = vxor.u32 %v1604, 2147483648
    %v1608 = vmul.f32 %v1607, 1.442695
    %v1609 = vpow.pop %v1608
    %v1610 = vadd.f32 %v1609, 1.0
    %v1611 = vrcp.pop %v1610
    %v1612 = vmul.f32 1.0, %v1611
    %v1613 = vtanh.pop %v1604
    %v1614 = vmul.f32 %v1612, %v1410
    %1616 = vrot.lane.b32.xlu0 %v1613, 120
    %v1617 = vpop.permute.xlu0 %1616
    %v1619 = vmul.f32 %v1612, %v1617
    %1621 = vrot.lane.b32.xlu0 %v1619, 4
    %v1622 = vpop.permute.xlu0 %1621
    %v1624 = vadd.f32 %v1614, %v1622
    %v1625 = vtanh.pop %v1624
    %1627 = vrot.lane.b32.xlu0 %v1625, 8
    %v1628 = vpop.permute.xlu0 %1627
    %v1630 = vmul.f32 %v1612, %v1628
    %v1631 = vrot.slane %v1522, 4
    %1632 = vrot.lane.b32.xlu0 %v1631, 116
    %v1633 = vpop.permute.xlu0 %1632
    %v1634 = vsel %vm147, %v1633, 0
    %1636 = vmatprep.subr.mxu0 0.0
    %1637 = vmatpush1.msra.mxu0 %v152
    %1638 = vmatprep.subr.mxu0 0.0
    %1639 = vmatpush1.msra.mxu0 0.0
    %1640 = vmatprep.subr.mxu0 0.0
    %1641 = vmatpush1.msra.mxu0 0.0
    %1642 = vmatprep.subr.mxu0 0.0
    %1643 = vmatpush1.msra.mxu0 0.0
    %1644 = vmatprep.subr.mxu0 0.0
    %1645 = vmatpush1.msra.mxu0 0.0
    %1646 = vmatprep.subr.mxu0 0.0
    %1647 = vmatpush1.msra.mxu0 0.0
    %1648 = vmatprep.subr.mxu0 0.0
    %1649 = vmatpush1.msra.mxu0 0.0
    %1650 = vmatprep.subr.mxu0 0.0
    %1651 = vmatpush1.msra.mxu0 0.0
    %1652 = vmatprep.subr.mxu0 0.0
    %1653 = vmatpush1.msra.mxu0 0.0
    %1654 = vmatprep.subr.mxu0 0.0
    %1655 = vmatpush1.msra.mxu0 0.0
    %1656 = vmatprep.subr.mxu0 0.0
    %1657 = vmatpush1.msra.mxu0 0.0
    %1658 = vmatprep.subr.mxu0 0.0
    %1659 = vmatpush1.msra.mxu0 0.0
    %1660 = vmatprep.subr.mxu0 0.0
    %1661 = vmatpush1.msra.mxu0 0.0
    %1662 = vmatprep.subr.mxu0 0.0
    %1663 = vmatpush1.msra.mxu0 0.0
    %1664 = vmatprep.subr.mxu0 0.0
    %1665 = vmatpush1.msra.mxu0 0.0
    %1666 = vmatprep.subr.mxu0 0.0
    %1667 = vmatpush1.msra.mxu0 0.0
    %1668 = vmatprep.subr.mxu0 0.0
    %1669 = vmatpush1.msra.mxu0 0.0
    %1670 = vmatprep.subr.mxu0 0.0
    %1671 = vmatpush1.msra.mxu0 0.0
    %1672 = vmatprep.subr.mxu0 0.0
    %1673 = vmatpush1.msra.mxu0 0.0
    %1674 = vmatprep.subr.mxu0 0.0
    %1675 = vmatpush1.msra.mxu0 0.0
    %1676 = vmatprep.subr.mxu0 0.0
    %1677 = vmatpush1.msra.mxu0 0.0
    %1678 = vmatprep.subr.mxu0 0.0
    %1679 = vmatpush1.msra.mxu0 0.0
    %1680 = vmatprep.subr.mxu0 0.0
    %1681 = vmatpush1.msra.mxu0 0.0
    %1682 = vmatprep.subr.mxu0 0.0
    %1683 = vmatpush1.msra.mxu0 0.0
    %1684 = vmatprep.subr.mxu0 0.0
    %1685 = vmatpush1.msra.mxu0 0.0
    %1686 = vmatprep.subr.mxu0 0.0
    %1687 = vmatpush1.msra.mxu0 0.0
    %1688 = vmatprep.subr.mxu0 0.0
    %1689 = vmatpush1.msra.mxu0 0.0
    %1690 = vmatprep.subr.mxu0 0.0
    %1691 = vmatpush1.msra.mxu0 0.0
    %1692 = vmatprep.subr.mxu0 0.0
    %1693 = vmatpush1.msra.mxu0 0.0
    %1694 = vmatprep.subr.mxu0 0.0
    %1695 = vmatpush1.msra.mxu0 0.0
    %1696 = vmatprep.subr.mxu0 0.0
    %1697 = vmatpush1.msra.mxu0 0.0
    %1698 = vmatprep.subr.mxu0 0.0
    %1699 = vmatpush1.msra.mxu0 0.0
    %1700 = vmatprep.mubr.f32.mxu0 0.0
    %1701 = vmatmul.mubr.f32.gmra.mrb[0].mxu0 %v1634
    %v1702 = vpop.f32.mrb[0].mxu0
    %v1703 = vadd.f32 0.0, %v1702
    %v1704 = vpop.f32.mrb[0].mxu0
    %1705 = vdwg.mxu0
    %v1707 = vrot.slane %v1703, 2
    %v1709 = vadd.f32 %v144, %v1707
    %v1710 = vxor.u32 %v1709, 2147483648
    %v1711 = vmul.f32 %v1710, 1.442695
    %v1712 = vpow.pop %v1711
    %v1713 = vadd.f32 %v1712, 1.0
    %v1714 = vrcp.pop %v1713
    %v1715 = vmul.f32 1.0, %v1714
    %v1716 = vtanh.pop %v1709
    %v1718 = vrot.slane %v1516, 6
    %v1720 = vmul.f32 %v1715, %v1718
    %1722 = vrot.lane.b32.xlu0 %v1716, 120
    %v1723 = vpop.permute.xlu0 %1722
    %v1725 = vmul.f32 %v1715, %v1723
    %1727 = vrot.lane.b32.xlu0 %v1725, 4
    %v1728 = vpop.permute.xlu0 %1727
    %v1730 = vadd.f32 %v1720, %v1728
    %v1731 = vtanh.pop %v1730
    %1733 = vrot.lane.b32.xlu0 %v1731, 8
    %v1734 = vpop.permute.xlu0 %1733
    %v1736 = vmul.f32 %v1715, %v1734
    %1738 = vrot.lane.b32.xlu0 %v1736, 116
    %v1739 = vpop.permute.xlu0 %1738
    %v1742 = vrot.slane %v1630, 2
    %1743 = vrot.lane.b32.xlu0 %v1742, 120
    %v1744 = vpop.permute.xlu0 %1743
    %v1746 = vsel %vm147, %v1739, %v1744
    %v1748 = vrot.slane %v1746, 6
    %v1749 = vsel %vm260, %v1748, 0
    %1751 = vmatprep.subr.mxu0 0.0
    %1752 = vmatpush1.msra.mxu0 %v46
    %1753 = vmatprep.subr.mxu0 0.0
    %1754 = vmatpush1.msra.mxu0 0.0
    %1755 = vmatprep.subr.mxu0 0.0
    %1756 = vmatpush1.msra.mxu0 0.0
    %1757 = vmatprep.subr.mxu0 0.0
    %1758 = vmatpush1.msra.mxu0 0.0
    %1759 = vmatprep.subr.mxu0 0.0
    %1760 = vmatpush1.msra.mxu0 0.0
    %1761 = vmatprep.subr.mxu0 0.0
    %1762 = vmatpush1.msra.mxu0 0.0
    %1763 = vmatprep.subr.mxu0 0.0
    %1764 = vmatpush1.msra.mxu0 0.0
    %1765 = vmatprep.subr.mxu0 0.0
    %1766 = vmatpush1.msra.mxu0 0.0
    %1767 = vmatprep.subr.mxu0 0.0
    %1768 = vmatpush1.msra.mxu0 0.0
    %1769 = vmatprep.subr.mxu0 0.0
    %1770 = vmatpush1.msra.mxu0 0.0
    %1771 = vmatprep.subr.mxu0 0.0
    %1772 = vmatpush1.msra.mxu0 0.0
    %1773 = vmatprep.subr.mxu0 0.0
    %1774 = vmatpush1.msra.mxu0 0.0
    %1775 = vmatprep.subr.mxu0 0.0
    %1776 = vmatpush1.msra.mxu0 0.0
    %1777 = vmatprep.subr.mxu0 0.0
    %1778 = vmatpush1.msra.mxu0 0.0
    %1779 = vmatprep.subr.mxu0 0.0
    %1780 = vmatpush1.msra.mxu0 0.0
    %1781 = vmatprep.subr.mxu0 0.0
    %1782 = vmatpush1.msra.mxu0 0.0
    %1783 = vmatprep.subr.mxu0 0.0
    %1784 = vmatpush1.msra.mxu0 0.0
    %1785 = vmatprep.subr.mxu0 0.0
    %1786 = vmatpush1.msra.mxu0 0.0
    %1787 = vmatprep.subr.mxu0 0.0
    %1788 = vmatpush1.msra.mxu0 0.0
    %1789 = vmatprep.subr.mxu0 0.0
    %1790 = vmatpush1.msra.mxu0 0.0
    %1791 = vmatprep.subr.mxu0 0.0
    %1792 = vmatpush1.msra.mxu0 0.0
    %1793 = vmatprep.subr.mxu0 0.0
    %1794 = vmatpush1.msra.mxu0 0.0
    %1795 = vmatprep.subr.mxu0 0.0
    %1796 = vmatpush1.msra.mxu0 0.0
    %1797 = vmatprep.subr.mxu0 0.0
    %1798 = vmatpush1.msra.mxu0 0.0
    %1799 = vmatprep.subr.mxu0 0.0
    %1800 = vmatpush1.msra.mxu0 0.0
    %1801 = vmatprep.subr.mxu0 0.0
    %1802 = vmatpush1.msra.mxu0 0.0
    %1803 = vmatprep.subr.mxu0 0.0
    %1804 = vmatpush1.msra.mxu0 0.0
    %1805 = vmatprep.subr.mxu0 0.0
    %1806 = vmatpush1.msra.mxu0 0.0
    %1807 = vmatprep.subr.mxu0 0.0
    %1808 = vmatpush1.msra.mxu0 0.0
    %1809 = vmatprep.subr.mxu0 0.0
    %1810 = vmatpush1.msra.mxu0 0.0
    %1811 = vmatprep.subr.mxu0 0.0
    %1812 = vmatpush1.msra.mxu0 0.0
    %1813 = vmatprep.subr.mxu0 0.0
    %1814 = vmatpush1.msra.mxu0 0.0
    %1815 = vmatprep.mubr.f32.mxu0 0.0
    %1816 = vmatmul.mubr.f32.gmra.mrb[0].mxu0 %v1749
    %v1817 = vpop.f32.mrb[0].mxu0
    %v1818 = vadd.f32 %v258, %v1817
    %v1819 = vpop.f32.mrb[0].mxu0
    %1820 = vdwg.mxu0
    %v1821 = vxor.u32 %v1818, 2147483648
    %v1822 = vmul.f32 %v1821, 1.442695
    %v1823 = vpow.pop %v1822
    %v1824 = vadd.f32 %v1823, 1.0
    %v1825 = vrcp.pop %v1824
    %v1826 = vmul.f32 1.0, %v1825
    %v1827 = vtanh.pop %v1818
    %v1828 = vmul.f32 %v1826, %v1624
    %1830 = vrot.lane.b32.xlu0 %v1827, 120
    %v1831 = vpop.permute.xlu0 %1830
    %v1833 = vmul.f32 %v1826, %v1831
    %1835 = vrot.lane.b32.xlu0 %v1833, 4
    %v1836 = vpop.permute.xlu0 %1835
    %v1838 = vadd.f32 %v1828, %v1836
    %v1839 = vtanh.pop %v1838
    %1841 = vrot.lane.b32.xlu0 %v1839, 8
    %v1842 = vpop.permute.xlu0 %1841
    %v1844 = vmul.f32 %v1826, %v1842
    %v1845 = vrot.slane %v568, 6
    %v1847 = vrot.slane %v782, 4
    %v1849 = vrot.slane %v996, 2
    %v1851 = vrot.slane %v1416, 6
    %v1853 = vrot.slane %v1630, 4
    %v1856 = vrot.slane %v1844, 2
    %vm1858 = vcmask 1041408
    %v1859 = vsel %vm1858, %v357, %v1845
    %v1860 = vsel %vm68, %v1859, %v1847
    %vm1861 = vcmask 1045504
    %v1862 = vsel %vm1861, %v1860, %v1849
    %v1863 = vsel %vm1858, %v1205, %v1851
    %v1864 = vsel %vm68, %v1863, %v1853
    %v1865 = vsel %vm1861, %v1864, %v1856
    %v1867 = vlaneseq
    %v1868 = vshrl.u32 %v1867, 7
    %v1869 = vsub.s32 0, %v1868
    %v1870 = vrot.slane %v49, %v1869
    %1874 = vrot.lane.b32.xlu0 %v1862, 116
    %v1875 = vpop.permute.xlu0 %1874
    %1876 = vrot.lane.b32.xlu0 %v1865, 116
    %v1877 = vpop.permute.xlu0 %1876
    %v1878 = vsel %vm147, %v1875, 0
    %v1880 = vsel %vm147, %v1877, 0
    %v1883 = vsel %vm68, %v48, 0
    %1885 = vmatprep.subr.mxu0 0.0
    %1886 = vmatpush1.msra.mxu0 %v1883
    %1887 = vmatprep.subr.mxu0 0.0
    %1888 = vmatpush1.msra.mxu0 0.0
    %1889 = vmatprep.subr.mxu0 0.0
    %1890 = vmatpush1.msra.mxu0 0.0
    %1891 = vmatprep.subr.mxu0 0.0
    %1892 = vmatpush1.msra.mxu0 0.0
    %1893 = vmatprep.subr.mxu0 0.0
    %1894 = vmatpush1.msra.mxu0 0.0
    %1895 = vmatprep.subr.mxu0 0.0
    %1896 = vmatpush1.msra.mxu0 0.0
    %1897 = vmatprep.subr.mxu0 0.0
    %1898 = vmatpush1.msra.mxu0 0.0
    %1899 = vmatprep.subr.mxu0 0.0
    %1900 = vmatpush1.msra.mxu0 0.0
    %1901 = vmatprep.subr.mxu0 0.0
    %1902 = vmatpush1.msra.mxu0 0.0
    %1903 = vmatprep.subr.mxu0 0.0
    %1904 = vmatpush1.msra.mxu0 0.0
    %1905 = vmatprep.subr.mxu0 0.0
    %1906 = vmatpush1.msra.mxu0 0.0
    %1907 = vmatprep.subr.mxu0 0.0
    %1908 = vmatpush1.msra.mxu0 0.0
    %1909 = vmatprep.subr.mxu0 0.0
    %1910 = vmatpush1.msra.mxu0 0.0
    %1911 = vmatprep.subr.mxu0 0.0
    %1912 = vmatpush1.msra.mxu0 0.0
    %1913 = vmatprep.subr.mxu0 0.0
    %1914 = vmatpush1.msra.mxu0 0.0
    %1915 = vmatprep.subr.mxu0 0.0
    %1916 = vmatpush1.msra.mxu0 0.0
    %1917 = vmatprep.subr.mxu0 0.0
    %1918 = vmatpush1.msra.mxu0 0.0
    %1919 = vmatprep.subr.mxu0 0.0
    %1920 = vmatpush1.msra.mxu0 0.0
    %1921 = vmatprep.subr.mxu0 0.0
    %1922 = vmatpush1.msra.mxu0 0.0
    %1923 = vmatprep.subr.mxu0 0.0
    %1924 = vmatpush1.msra.mxu0 0.0
    %1925 = vmatprep.subr.mxu0 0.0
    %1926 = vmatpush1.msra.mxu0 0.0
    %1927 = vmatprep.subr.mxu0 0.0
    %1928 = vmatpush1.msra.mxu0 0.0
    %1929 = vmatprep.subr.mxu0 0.0
    %1930 = vmatpush1.msra.mxu0 0.0
    %1931 = vmatprep.subr.mxu0 0.0
    %1932 = vmatpush1.msra.mxu0 0.0
    %1933 = vmatprep.subr.mxu0 0.0
    %1934 = vmatpush1.msra.mxu0 0.0
    %1935 = vmatprep.subr.mxu0 0.0
    %1936 = vmatpush1.msra.mxu0 0.0
    %1937 = vmatprep.subr.mxu0 0.0
    %1938 = vmatpush1.msra.mxu0 0.0
    %1939 = vmatprep.subr.mxu0 0.0
    %1940 = vmatpush1.msra.mxu0 0.0
    %1941 = vmatprep.subr.mxu0 0.0
    %1942 = vmatpush1.msra.mxu0 0.0
    %1943 = vmatprep.subr.mxu0 0.0
    %1944 = vmatpush1.msra.mxu0 0.0
    %1945 = vmatprep.subr.mxu0 0.0
    %1946 = vmatpush1.msra.mxu0 0.0
    %1947 = vmatprep.subr.mxu0 0.0
    %1948 = vmatpush1.msra.mxu0 0.0
    %1949 = vmatprep.mubr.f32.mxu0 0.0
    %1950 = vmatmul.mubr.f32.gmra.mrb[0].mxu0 %v1878
    %v1951 = vpop.f32.mrb[0].mxu0
    %v1952 = vadd.f32 %v1870, %v1951
    %v1953 = vpop.f32.mrb[0].mxu0
    %1954 = vmatprep.mubr.f32.mxu0 0.0
    %1955 = vmatmul.mubr.f32.gmra.mrb[0].mxu0 %v1880
    %v1956 = vpop.f32.mrb[0].mxu0
    %v1957 = vadd.f32 %v1870, %v1956
    %v1958 = vpop.f32.mrb[0].mxu0
    %1959 = vdwg.mxu0
    %vm1960 = vcmask 7168
    %1961 = vst.msk [vmem:[%s8] sm:$0xff] %vm1960, %v1952
    %1962 = vst.msk [vmem:[%s8 + $0x8] sm:$0xff] %vm1960, %v1957
    // Predicated region
    $region38: #{lstm_forward.1} parent=1 // pred_check
      _
    $region39: #{lstm_forward.1} parent=1 // pred_check_branch
      %1964 = sbr.rel (0) target = $region41
    $region40: #{lstm_forward.1} parent=1 // pred_region
      _
    $region41: #{lstm_forward.1} parent=1 // pred_fallthru
      _
    // Predicated region
    $region42: #{lstm_forward.1} parent=1 // pred_check
      _
    $region43: #{lstm_forward.1} parent=1 // pred_check_branch
      %1966 = sbr.rel (0) target = $region45
    $region44: #{lstm_forward.1} parent=1 // pred_region
      _
    $region45: #{lstm_forward.1} parent=1 // pred_fallthru
      _
    %1967 = vsyncpa [#allocation4], 1

</llo_original>
